<compile_context>
chip_gen: v6e
topology: v6e:2x2x1
jax: 0.10.0
libtpu: 0.0.40
codegen_flags: <defaults>
</compile_context>

<pallas_src>
import functools

import jax
import jax.numpy as jnp
import numpy as np
from jax.experimental import pallas as pl
from jax.experimental.pallas import tpu as pltpu

NEG_BIG = -1e30  # stand-in for -inf (same softmax result, avoids inf-inf NaN paths)


def _gate_kernel(xT_ref, w_ref, b_ref, h_ref, y_ref, gpT_ref, gp_sc, *, k, inv_tau):
    # ---- gating math, once per batch tile (d == 0); lane-dense (E sublanes, TB lanes)
    @pl.when(pl.program_id(1) == 0)
    def _():
        xT = xT_ref[...].astype(jnp.float32)                       # (Din, TB)
        w = w_ref[...].astype(jnp.float32)                         # (E, Din)
        logits = jnp.dot(w, xT, preferred_element_type=jnp.float32)  # (E, TB) on MXU
        logits = (logits + b_ref[...].astype(jnp.float32)) * inv_tau
        nE, nB = logits.shape

        # dense softmax g over experts (exact division; EUP slot has huge slack here)
        m = jnp.max(logits, axis=0, keepdims=True)
        ex = jnp.exp(logits - m)
        sum_ex = jnp.sum(ex, axis=0, keepdims=True)
        g = ex / sum_ex

        # deterministic top-k mask over logits (lowest index wins ties, like torch.topk)
        iota = jax.lax.broadcasted_iota(jnp.int32, (nE, nB), 0)
        mask = jnp.zeros((nE, nB), dtype=jnp.bool_)
        work = logits
        for _ in range(k):
            mx = jnp.max(work, axis=0, keepdims=True)
            cand = jnp.where(work >= mx, iota, nE)
            idx = jnp.min(cand, axis=0, keepdims=True)
            sel = iota == idx
            mask = jnp.logical_or(mask, sel)
            work = jnp.where(sel, jnp.float32(NEG_BIG), work)

        # adjusted logits on the selected experts, -inf elsewhere (module's clamp kept)
        adj = logits - jnp.log(jnp.maximum(jnp.float32(k) * (g + 1e-10), 1e-10))
        adj = jnp.where(mask, adj, jnp.float32(NEG_BIG))

        # sparse softmax g' (approx reciprocal is fine: off-mask entries are exactly 0)
        m2 = jnp.max(adj, axis=0, keepdims=True)
        ex2 = jnp.where(mask, jnp.exp(adj - m2), 0.0)
        gp_t = ex2 * pl.reciprocal(jnp.sum(ex2, axis=0, keepdims=True), approx=True)

        gpT_ref[...] = gp_t.astype(gpT_ref.dtype)                  # (E, TB) lane-dense
        gp_sc[...] = gp_t.T.astype(jnp.float32)                    # (TB, E) cached for all D chunks

    # ---- combine this D chunk: y[b, :] = sum_e gp[b, e] * h[e, b, :] -------------
    gp = gp_sc[...]                                                # (TB, E) f32
    acc = gp[:, 0:1] * h_ref[0].astype(jnp.float32)                # f32 accumulate (h may be bf16)
    for e in range(1, h_ref.shape[0]):
        acc = acc + gp[:, e:e + 1] * h_ref[e].astype(jnp.float32)
    y_ref[...] = acc.astype(y_ref.dtype)


def _choose_tiles(B, E, D, Din, h_itemsize, y_itemsize):
    """Pick (batch tile, D chunk, vmem_limit) with generation-aware VMEM accounting."""
    try:
        phys = int(pltpu.get_tpu_info().vmem_capacity_bytes)       # 128 MiB v5e/v6e, 64 MiB v7x
    except Exception:
        phys = 64 * 1024 * 1024                                    # v7x-safe fallback
    vmem_limit = min(int(phys * 0.55), 96 * 1024 * 1024)           # scoped limit we request
    budget = int(vmem_limit * 0.80)                                # plan residents w/ headroom

    def usage(tb, dc):
        return (2 * E * tb * dc * h_itemsize                       # h tile, double-buffered
                + 2 * Din * tb * 4                                 # x^T tile (f32)
                + 2 * tb * dc * y_itemsize                         # y tile
                + 2 * E * tb * 4                                   # gp^T tile (f32)
                + tb * 128 * 4                                     # gp scratch (lane-padded)
                + 2 * E * Din * 4 + 2 * E * 128 * 4                # w, b
                + 3 * tb * dc * 4)                                 # f32 combine intermediates

    # Batch-tile candidates: lane-aligned (tb % 128 == 0 or tb == B), <= 1024,
    # and >= 2 tiles whenever B >= 256 so both v7x TensorCores get work.
    if B <= 128:
        tbs = [B]
    else:
        tb_max = min(1024, (B // 128) * 128)
        if B >= 256:
            tb_max = min(tb_max, ((B // 2) // 128) * 128)
        tb_max = max(tb_max, 128)
        tbs = list(range(tb_max, 0, -128))

    for tb in tbs:
        fixed = usage(tb, 0)
        per_dc = tb * (2 * E * h_itemsize + 2 * y_itemsize + 3 * 4)
        avail = budget - fixed
        if avail <= 0:
            continue
        dc = min(D, (avail // max(1, per_dc)) // 128 * 128)
        if dc >= 128:
            return tb, dc, vmem_limit

    # Extreme shapes: smallest tiles, raise the scoped limit toward physical.
    tb = tbs[-1]
    dc = min(D, 128)
    vmem_limit = min(int(phys * 0.90), max(vmem_limit, usage(tb, dc) + (8 << 20)))
    return tb, dc, vmem_limit


def sample_k_softmax_gate(h, x, w, b, *, k, tau, block_b=None, block_d=None, out_dtype=None):
    """Eval forward of SampleKSoftmaxUnbiasedWithTrimmedLassoGate.

    h : (E, B, D) pre-stacked expert outputs (bf16 recommended: the kernel is
        HBM-bound on this stream and accumulates in f32), or a list of E (B, D) arrays.
    x : (B, Din) routing input
    w : (E, Din) gate weight (torch nn.Linear layout)
    b : (E,)     gate bias
    returns (y, soft_averages, hard_averages, s_concat, loss)
    """
    if isinstance(h, (list, tuple)):
        h = jnp.stack(h, axis=0)
    E, B, D = h.shape
    Din = x.shape[-1]
    out_dtype = h.dtype if out_dtype is None else out_dtype

    # Pad D to a multiple of 128 so y stores stay lane-dense (unmasked vst); slice after.
    D_pad = ((D + 127) // 128) * 128
    if D_pad != D:
        h = jnp.pad(h, ((0, 0), (0, 0), (0, D_pad - D)))

    x_t = jnp.swapaxes(x, 0, 1).astype(jnp.float32)                # (Din, B): tiny vs h
    b2 = jnp.reshape(b, (E, 1)).astype(jnp.float32)

    tb, dc, vmem_limit = _choose_tiles(B, E, D_pad, Din, h.dtype.itemsize,
                                       jnp.dtype(out_dtype).itemsize)
    if block_b is not None:
        tb = int(block_b)
    if block_d is not None:
        dc = int(block_d)

    grid = (pl.cdiv(B, tb), pl.cdiv(D_pad, dc))
    kernel = functools.partial(_gate_kernel, k=int(k), inv_tau=float(1.0 / float(tau)))

    y, gp_t = pl.pallas_call(
        kernel,
        grid=grid,
        in_specs=[
            pl.BlockSpec((Din, tb), lambda i, d: (0, i)),          # x^T batch tile
            pl.BlockSpec((E, Din), lambda i, d: (0, 0)),           # gate weight (whole, small)
            pl.BlockSpec((E, 1), lambda i, d: (0, 0)),             # gate bias
            pl.BlockSpec((E, tb, dc), lambda i, d: (0, i, d)),     # expert-output slab
        ],
        out_specs=(
            pl.BlockSpec((tb, dc), lambda i, d: (i, d)),           # y tile (lane-dense on D)
            pl.BlockSpec((E, tb), lambda i, d: (0, i)),            # gp^T tile (lane-dense on batch)
        ),
        out_shape=(
            jax.ShapeDtypeStruct((B, D_pad), out_dtype),
            jax.ShapeDtypeStruct((E, B), jnp.float32),
        ),
        scratch_shapes=[pltpu.VMEM((tb, E), jnp.float32)],         # gp cached across D chunks
        compiler_params=pltpu.CompilerParams(
            dimension_semantics=("parallel", "arbitrary"),         # batch tiles across TCs
            vmem_limit_bytes=int(vmem_limit),
        ),
    )(x_t, w, b2, h)

    if D_pad != D:
        y = y[:, :D]

    # Cheap O(B*E) post-processing stays in XLA (keeps tiling clean, no padded-row pollution).
    gp = gp_t.T                                                    # (B, E)
    s_concat = jnp.where(gp < 1e-5, 1.0, 0.0)[..., None]           # (B, E, 1)
    soft_averages = jnp.mean(gp, axis=0).reshape(E, 1)
    hard_averages = jnp.mean(1.0 - s_concat[..., 0], axis=0).reshape(E, 1)
    loss = jnp.zeros((), jnp.float32)                              # eval: trimmed-lasso loss is training-only
    return y, soft_averages, hard_averages, s_concat, loss


def _reference(h, x, w, b, *, k, tau):
    """Pure-JAX reference of the eval forward. h: (E, B, D) (any float dtype), w: (E, Din)."""
    hf = h.astype(jnp.float32)
    logits = (x @ w.T + b[None, :]) / tau
    g = jax.nn.softmax(logits, axis=-1)
    _, idx = jax.lax.top_k(logits, k)
    mask = jnp.zeros_like(logits)
    mask = jax.vmap(lambda m, i: m.at[i].set(1.0))(mask, idx)
    adj = jnp.where(mask == 0.0, -jnp.inf, logits)
    adj = adj - jnp.log(jnp.maximum(k * (g + 1e-10), 1e-10))
    adj = jnp.where(mask == 0.0, -jnp.inf, adj)
    gp = jax.nn.softmax(adj, axis=-1)
    y = jnp.einsum("ebd,be->bd", hf, gp)
    s = jnp.where(gp < 1e-5, 1.0, 0.0)[..., None]
    soft = jnp.mean(gp[..., None], axis=0)
    hard = jnp.mean(1.0 - s, axis=0)
    return y, soft, hard, s, jnp.zeros((), jnp.float32)


if __name__ == "__main__":
    # Small-but-representative shapes: D lane-dense (multiple of 128), two batch tiles.
    B = 256          # batch
    DIN = 64         # input_dim (routing features)
    E = 8            # nb_experts
    D = 128          # expert output hidden dim
    K = 2            # top-k
    TAU = 1.0

    key = jax.random.PRNGKey(0)
    kx, kw, kh = jax.random.split(key, 3)
    x = jax.random.normal(kx, (B, DIN), dtype=jnp.float32)
    # gate Linear(input_dim, nb_experts): weight (E, Din), bias zeros per init_weights()
    w = jax.random.normal(kw, (E, DIN), dtype=jnp.float32) * (1.0 / np.sqrt(DIN))
    b = jnp.zeros((E,), dtype=jnp.float32)
    # h stored in bf16: halves the dominant HBM stream; the kernel accumulates in f32.
    h_stacked = jax.random.normal(kh, (E, B, D), dtype=jnp.float32).astype(jnp.bfloat16)

    outs = sample_k_softmax_gate(h_stacked, x, w, b, k=K, tau=TAU)
    outs = jax.block_until_ready(outs)

    refs = _reference(h_stacked, x, w, b, k=K, tau=TAU)
    # bf16 h/y storage + approx EUP reciprocal in the final normalization -> modest tolerance
    for o, r in zip(outs[:4], refs[:4]):
        np.testing.assert_allclose(np.asarray(o, dtype=np.float32),
                                   np.asarray(r, dtype=np.float32),
                                   rtol=2e-2, atol=2e-2)

    print("KERNEL_OK")
</pallas_src>

<mosaic_0001>
module attributes {stable_mosaic.version = 11 : i64} {
  func.func @_gate_kernel(%arg0: i32, %arg1: i32, %arg2: memref<64x128xf32, #tpu.memory_space<vmem>>, %arg3: memref<8x64xf32, #tpu.memory_space<vmem>>, %arg4: memref<8x1xf32, #tpu.memory_space<vmem>>, %arg5: memref<8x128x128xbf16, #tpu.memory_space<vmem>>, %arg6: memref<128x128xbf16, #tpu.memory_space<vmem>>, %arg7: memref<8x128xf32, #tpu.memory_space<vmem>>, %arg8: memref<128x8xf32, #tpu.memory_space<vmem>>) attributes {dimension_semantics = [#tpu.dimension_semantics<parallel>, #tpu.dimension_semantics<arbitrary>], iteration_bounds = array<i64: 2, 1>, scalar_prefetch = 0 : i64, scratch_operands = 1 : i64, tpu.core_type = #tpu.core_type<tc>, window_params = [{transform_indices = @transform_0, window_bounds = array<i64: 64, 128>}, {pipeline_mode = #tpu.pipeline_mode<synchronous>, transform_indices = @transform_1, window_bounds = array<i64: 8, 64>}, {pipeline_mode = #tpu.pipeline_mode<synchronous>, transform_indices = @transform_2, window_bounds = array<i64: 8, 1>}, {transform_indices = @transform_3, window_bounds = array<i64: 8, 128, 128>}, {transform_indices = @transform_4, window_bounds = array<i64: 128, 128>}, {transform_indices = @transform_5, window_bounds = array<i64: 8, 128>}]} {
    %c0_i32 = arith.constant 0 : i32
    %0 = arith.cmpi eq, %arg1, %c0_i32 : i32
    %1 = arith.extui %0 : i1 to i32
    %c0_i32_0 = arith.constant 0 : i32
    %2 = arith.cmpi ne, %1, %c0_i32_0 : i32
    scf.if %2 {
      %c0_21 = arith.constant 0 : index
      %c0_22 = arith.constant 0 : index
      %61 = vector.load %arg2[%c0_21, %c0_22] : memref<64x128xf32, #tpu.memory_space<vmem>>, vector<64x128xf32>
      %c0_23 = arith.constant 0 : index
      %c0_24 = arith.constant 0 : index
      %62 = vector.load %arg3[%c0_23, %c0_24] : memref<8x64xf32, #tpu.memory_space<vmem>>, vector<8x64xf32>
      %cst = arith.constant dense<0.000000e+00> : vector<8x128xf32>
      %63 = tpu.matmul %62, %61, %cst {dimension_numbers = #tpu.dot_dimension_numbers<[1], [0], [0], [1], [0, 0, 1, 1], [], []>} : vector<8x64xf32>, vector<64x128xf32>, vector<8x128xf32> -> vector<8x128xf32>
      %c0_25 = arith.constant 0 : index
      %c0_26 = arith.constant 0 : index
      %64 = vector.load %arg4[%c0_25, %c0_26] : memref<8x1xf32, #tpu.memory_space<vmem>>, vector<8x1xf32>
      %65 = vector.broadcast %64 : vector<8x1xf32> to vector<8x128xf32>
      %66 = arith.addf %63, %65 : vector<8x128xf32>
      %cst_27 = arith.constant 1.000000e+00 : f32
      %67 = vector.broadcast %cst_27 : f32 to vector<8x128xf32>
      %68 = arith.mulf %66, %67 : vector<8x128xf32>
      %cst_28 = arith.constant dense<0xFF800000> : vector<128xf32>
      %69 = vector.multi_reduction <maximumf>, %68, %cst_28 [0] : vector<8x128xf32> to vector<128xf32>
      %70 = vector.shape_cast %69 : vector<128xf32> to vector<1x128xf32>
      %71 = vector.broadcast %70 : vector<1x128xf32> to vector<8x128xf32>
      %72 = arith.subf %68, %71 : vector<8x128xf32>
      %73 = math.exp %72 : vector<8x128xf32>
      %cst_29 = arith.constant dense<0.000000e+00> : vector<128xf32>
      %74 = vector.multi_reduction <add>, %73, %cst_29 [0] : vector<8x128xf32> to vector<128xf32>
      %75 = vector.shape_cast %74 : vector<128xf32> to vector<1x128xf32>
      %76 = vector.broadcast %75 : vector<1x128xf32> to vector<8x128xf32>
      %77 = arith.divf %73, %76 : vector<8x128xf32>
      %78 = tpu.iota {dimensions = array<i32: 0>} : vector<8x128xi32>
      %false = arith.constant false
      %79 = vector.broadcast %false : i1 to vector<8x128xi1>
      %cst_30 = arith.constant dense<0xFF800000> : vector<128xf32>
      %80 = vector.multi_reduction <maximumf>, %68, %cst_30 [0] : vector<8x128xf32> to vector<128xf32>
      %81 = vector.shape_cast %80 : vector<128xf32> to vector<1x128xf32>
      %82 = vector.broadcast %81 : vector<1x128xf32> to vector<8x128xf32>
      %83 = arith.cmpf oge, %68, %82 : vector<8x128xf32>
      %c8_i32 = arith.constant 8 : i32
      %84 = vector.broadcast %c8_i32 : i32 to vector<8x128xi32>
      %85 = arith.select %83, %78, %84 : vector<8x128xi1>, vector<8x128xi32>
      %cst_31 = arith.constant dense<2147483647> : vector<128xi32>
      %86 = vector.multi_reduction <minsi>, %85, %cst_31 [0] : vector<8x128xi32> to vector<128xi32>
      %87 = vector.shape_cast %86 : vector<128xi32> to vector<1x128xi32>
      %88 = vector.broadcast %87 : vector<1x128xi32> to vector<8x128xi32>
      %89 = arith.cmpi eq, %78, %88 : vector<8x128xi32>
      %90 = arith.ori %79, %89 : vector<8x128xi1>
      %cst_32 = arith.constant -1.000000e+30 : f32
      %91 = vector.broadcast %cst_32 : f32 to vector<8x128xf32>
      %92 = arith.select %89, %91, %68 : vector<8x128xi1>, vector<8x128xf32>
      %cst_33 = arith.constant dense<0xFF800000> : vector<128xf32>
      %93 = vector.multi_reduction <maximumf>, %92, %cst_33 [0] : vector<8x128xf32> to vector<128xf32>
      %94 = vector.shape_cast %93 : vector<128xf32> to vector<1x128xf32>
      %95 = vector.broadcast %94 : vector<1x128xf32> to vector<8x128xf32>
      %96 = arith.cmpf oge, %92, %95 : vector<8x128xf32>
      %c8_i32_34 = arith.constant 8 : i32
      %97 = vector.broadcast %c8_i32_34 : i32 to vector<8x128xi32>
      %98 = arith.select %96, %78, %97 : vector<8x128xi1>, vector<8x128xi32>
      %cst_35 = arith.constant dense<2147483647> : vector<128xi32>
      %99 = vector.multi_reduction <minsi>, %98, %cst_35 [0] : vector<8x128xi32> to vector<128xi32>
      %100 = vector.shape_cast %99 : vector<128xi32> to vector<1x128xi32>
      %101 = vector.broadcast %100 : vector<1x128xi32> to vector<8x128xi32>
      %102 = arith.cmpi eq, %78, %101 : vector<8x128xi32>
      %103 = arith.ori %90, %102 : vector<8x128xi1>
      %cst_36 = arith.constant 1.000000e-10 : f32
      %104 = vector.broadcast %cst_36 : f32 to vector<8x128xf32>
      %105 = arith.addf %77, %104 : vector<8x128xf32>
      %cst_37 = arith.constant 2.000000e+00 : f32
      %106 = vector.broadcast %cst_37 : f32 to vector<8x128xf32>
      %107 = arith.mulf %106, %105 : vector<8x128xf32>
      %cst_38 = arith.constant 1.000000e-10 : f32
      %108 = vector.broadcast %cst_38 : f32 to vector<8x128xf32>
      %109 = arith.maximumf %107, %108 : vector<8x128xf32>
      %110 = math.log %109 : vector<8x128xf32>
      %111 = arith.subf %68, %110 : vector<8x128xf32>
      %cst_39 = arith.constant -1.000000e+30 : f32
      %112 = vector.broadcast %cst_39 : f32 to vector<8x128xf32>
      %113 = arith.select %103, %111, %112 : vector<8x128xi1>, vector<8x128xf32>
      %cst_40 = arith.constant dense<0xFF800000> : vector<128xf32>
      %114 = vector.multi_reduction <maximumf>, %113, %cst_40 [0] : vector<8x128xf32> to vector<128xf32>
      %115 = vector.shape_cast %114 : vector<128xf32> to vector<1x128xf32>
      %116 = vector.broadcast %115 : vector<1x128xf32> to vector<8x128xf32>
      %117 = arith.subf %113, %116 : vector<8x128xf32>
      %118 = math.exp %117 : vector<8x128xf32>
      %cst_41 = arith.constant 0.000000e+00 : f32
      %119 = vector.broadcast %cst_41 : f32 to vector<8x128xf32>
      %120 = arith.select %103, %118, %119 : vector<8x128xi1>, vector<8x128xf32>
      %cst_42 = arith.constant dense<0.000000e+00> : vector<128xf32>
      %121 = vector.multi_reduction <add>, %120, %cst_42 [0] : vector<8x128xf32> to vector<128xf32>
      %122 = vector.shape_cast %121 : vector<128xf32> to vector<1x128xf32>
      %123 = tpu.reciprocal %122 {approx = true} : vector<1x128xf32> -> vector<1x128xf32>
      %124 = vector.broadcast %123 : vector<1x128xf32> to vector<8x128xf32>
      %125 = arith.mulf %120, %124 : vector<8x128xf32>
      %c0_43 = arith.constant 0 : index
      %c0_44 = arith.constant 0 : index
      %126 = vector.load %arg7[%c0_43, %c0_44] : memref<8x128xf32, #tpu.memory_space<vmem>>, vector<8x128xf32>
      tpu.vector_store %arg7[%c0_43, %c0_44], %125 {strides = array<i32>} : memref<8x128xf32, #tpu.memory_space<vmem>>, vector<8x128xf32>,
      %127 = tpu.transpose %125, [1, 0] : vector<8x128xf32> -> vector<128x8xf32>
      %c0_45 = arith.constant 0 : index
      %c0_46 = arith.constant 0 : index
      %128 = vector.load %arg8[%c0_45, %c0_46] : memref<128x8xf32, #tpu.memory_space<vmem>>, vector<128x8xf32>
      tpu.vector_store %arg8[%c0_45, %c0_46], %127 {strides = array<i32>} : memref<128x8xf32, #tpu.memory_space<vmem>>, vector<128x8xf32>,
    } else {
    }
    %c0 = arith.constant 0 : index
    %c0_1 = arith.constant 0 : index
    %3 = vector.load %arg8[%c0, %c0_1] : memref<128x8xf32, #tpu.memory_space<vmem>>, vector<128x8xf32>
    %4 = vector.extract_strided_slice %3 {offsets = [0, 0], sizes = [128, 1], strides = [1, 1]} : vector<128x8xf32> to vector<128x1xf32>
    %c0_2 = arith.constant 0 : index
    %c0_3 = arith.constant 0 : index
    %c0_4 = arith.constant 0 : index
    %5 = vector.load %arg5[%c0_2, %c0_3, %c0_4] : memref<8x128x128xbf16, #tpu.memory_space<vmem>>, vector<1x128x128xbf16>
    %6 = vector.shape_cast %5 : vector<1x128x128xbf16> to vector<128x128xbf16>
    %7 = arith.extf %6 : vector<128x128xbf16> to vector<128x128xf32>
    %8 = vector.broadcast %4 : vector<128x1xf32> to vector<128x128xf32>
    %9 = arith.mulf %8, %7 : vector<128x128xf32>
    %10 = vector.extract_strided_slice %3 {offsets = [0, 1], sizes = [128, 1], strides = [1, 1]} : vector<128x8xf32> to vector<128x1xf32>
    %c1 = arith.constant 1 : index
    %c0_5 = arith.constant 0 : index
    %c0_6 = arith.constant 0 : index
    %11 = vector.load %arg5[%c1, %c0_5, %c0_6] : memref<8x128x128xbf16, #tpu.memory_space<vmem>>, vector<1x128x128xbf16>
    %12 = vector.shape_cast %11 : vector<1x128x128xbf16> to vector<128x128xbf16>
    %13 = arith.extf %12 : vector<128x128xbf16> to vector<128x128xf32>
    %14 = vector.broadcast %10 : vector<128x1xf32> to vector<128x128xf32>
    %15 = arith.mulf %14, %13 : vector<128x128xf32>
    %16 = arith.addf %9, %15 : vector<128x128xf32>
    %17 = vector.extract_strided_slice %3 {offsets = [0, 2], sizes = [128, 1], strides = [1, 1]} : vector<128x8xf32> to vector<128x1xf32>
    %c2 = arith.constant 2 : index
    %c0_7 = arith.constant 0 : index
    %c0_8 = arith.constant 0 : index
    %18 = vector.load %arg5[%c2, %c0_7, %c0_8] : memref<8x128x128xbf16, #tpu.memory_space<vmem>>, vector<1x128x128xbf16>
    %19 = vector.shape_cast %18 : vector<1x128x128xbf16> to vector<128x128xbf16>
    %20 = arith.extf %19 : vector<128x128xbf16> to vector<128x128xf32>
    %21 = vector.broadcast %17 : vector<128x1xf32> to vector<128x128xf32>
    %22 = arith.mulf %21, %20 : vector<128x128xf32>
    %23 = arith.addf %16, %22 : vector<128x128xf32>
    %24 = vector.extract_strided_slice %3 {offsets = [0, 3], sizes = [128, 1], strides = [1, 1]} : vector<128x8xf32> to vector<128x1xf32>
    %c3 = arith.constant 3 : index
    %c0_9 = arith.constant 0 : index
    %c0_10 = arith.constant 0 : index
    %25 = vector.load %arg5[%c3, %c0_9, %c0_10] : memref<8x128x128xbf16, #tpu.memory_space<vmem>>, vector<1x128x128xbf16>
    %26 = vector.shape_cast %25 : vector<1x128x128xbf16> to vector<128x128xbf16>
    %27 = arith.extf %26 : vector<128x128xbf16> to vector<128x128xf32>
    %28 = vector.broadcast %24 : vector<128x1xf32> to vector<128x128xf32>
    %29 = arith.mulf %28, %27 : vector<128x128xf32>
    %30 = arith.addf %23, %29 : vector<128x128xf32>
    %31 = vector.extract_strided_slice %3 {offsets = [0, 4], sizes = [128, 1], strides = [1, 1]} : vector<128x8xf32> to vector<128x1xf32>
    %c4 = arith.constant 4 : index
    %c0_11 = arith.constant 0 : index
    %c0_12 = arith.constant 0 : index
    %32 = vector.load %arg5[%c4, %c0_11, %c0_12] : memref<8x128x128xbf16, #tpu.memory_space<vmem>>, vector<1x128x128xbf16>
    %33 = vector.shape_cast %32 : vector<1x128x128xbf16> to vector<128x128xbf16>
    %34 = arith.extf %33 : vector<128x128xbf16> to vector<128x128xf32>
    %35 = vector.broadcast %31 : vector<128x1xf32> to vector<128x128xf32>
    %36 = arith.mulf %35, %34 : vector<128x128xf32>
    %37 = arith.addf %30, %36 : vector<128x128xf32>
    %38 = vector.extract_strided_slice %3 {offsets = [0, 5], sizes = [128, 1], strides = [1, 1]} : vector<128x8xf32> to vector<128x1xf32>
    %c5 = arith.constant 5 : index
    %c0_13 = arith.constant 0 : index
    %c0_14 = arith.constant 0 : index
    %39 = vector.load %arg5[%c5, %c0_13, %c0_14] : memref<8x128x128xbf16, #tpu.memory_space<vmem>>, vector<1x128x128xbf16>
    %40 = vector.shape_cast %39 : vector<1x128x128xbf16> to vector<128x128xbf16>
    %41 = arith.extf %40 : vector<128x128xbf16> to vector<128x128xf32>
    %42 = vector.broadcast %38 : vector<128x1xf32> to vector<128x128xf32>
    %43 = arith.mulf %42, %41 : vector<128x128xf32>
    %44 = arith.addf %37, %43 : vector<128x128xf32>
    %45 = vector.extract_strided_slice %3 {offsets = [0, 6], sizes = [128, 1], strides = [1, 1]} : vector<128x8xf32> to vector<128x1xf32>
    %c6 = arith.constant 6 : index
    %c0_15 = arith.constant 0 : index
    %c0_16 = arith.constant 0 : index
    %46 = vector.load %arg5[%c6, %c0_15, %c0_16] : memref<8x128x128xbf16, #tpu.memory_space<vmem>>, vector<1x128x128xbf16>
    %47 = vector.shape_cast %46 : vector<1x128x128xbf16> to vector<128x128xbf16>
    %48 = arith.extf %47 : vector<128x128xbf16> to vector<128x128xf32>
    %49 = vector.broadcast %45 : vector<128x1xf32> to vector<128x128xf32>
    %50 = arith.mulf %49, %48 : vector<128x128xf32>
    %51 = arith.addf %44, %50 : vector<128x128xf32>
    %52 = vector.extract_strided_slice %3 {offsets = [0, 7], sizes = [128, 1], strides = [1, 1]} : vector<128x8xf32> to vector<128x1xf32>
    %c7 = arith.constant 7 : index
    %c0_17 = arith.constant 0 : index
    %c0_18 = arith.constant 0 : index
    %53 = vector.load %arg5[%c7, %c0_17, %c0_18] : memref<8x128x128xbf16, #tpu.memory_space<vmem>>, vector<1x128x128xbf16>
    %54 = vector.shape_cast %53 : vector<1x128x128xbf16> to vector<128x128xbf16>
    %55 = arith.extf %54 : vector<128x128xbf16> to vector<128x128xf32>
    %56 = vector.broadcast %52 : vector<128x1xf32> to vector<128x128xf32>
    %57 = arith.mulf %56, %55 : vector<128x128xf32>
    %58 = arith.addf %51, %57 : vector<128x128xf32>
    %59 = arith.truncf %58 : vector<128x128xf32> to vector<128x128xbf16>
    %c0_19 = arith.constant 0 : index
    %c0_20 = arith.constant 0 : index
    %60 = vector.load %arg6[%c0_19, %c0_20] : memref<128x128xbf16, #tpu.memory_space<vmem>>, vector<128x128xbf16>
    tpu.vector_store %arg6[%c0_19, %c0_20], %59 {strides = array<i32>} : memref<128x128xbf16, #tpu.memory_space<vmem>>, vector<128x128xbf16>,
    return
  }
  func.func @transform_0(%arg0: i32, %arg1: i32) -> (i32, i32) {
    %c0_i32 = arith.constant 0 : i32
    %c0_i32_0 = arith.constant 0 : i32
    return %c0_i32, %arg0 : i32, i32
  }
  func.func @transform_1(%arg0: i32, %arg1: i32) -> (i32, i32) {
    %c0_i32 = arith.constant 0 : i32
    %c0_i32_0 = arith.constant 0 : i32
    %c0_i32_1 = arith.constant 0 : i32
    return %c0_i32, %c0_i32_0 : i32, i32
  }
  func.func @transform_2(%arg0: i32, %arg1: i32) -> (i32, i32) {
    %c0_i32 = arith.constant 0 : i32
    %c0_i32_0 = arith.constant 0 : i32
    %c0_i32_1 = arith.constant 0 : i32
    return %c0_i32, %c0_i32_0 : i32, i32
  }
  func.func @transform_3(%arg0: i32, %arg1: i32) -> (i32, i32, i32) {
    %c0_i32 = arith.constant 0 : i32
    %c0_i32_0 = arith.constant 0 : i32
    return %c0_i32, %arg0, %arg1 : i32, i32, i32
  }
  func.func @transform_4(%arg0: i32, %arg1: i32) -> (i32, i32) {
    %c0_i32 = arith.constant 0 : i32
    return %arg0, %arg1 : i32, i32
  }
  func.func @transform_5(%arg0: i32, %arg1: i32) -> (i32, i32) {
    %c0_i32 = arith.constant 0 : i32
    %c0_i32_0 = arith.constant 0 : i32
    return %c0_i32, %arg0 : i32, i32
  }
}

</mosaic_0001>

<llo_original>
// kernel: tpu_custom_call.1
$region0: #{tpu_custom_call.1}
  #allocation0 [shape = 'u32[]', space=smem, size = 0x4, offset = 0x4, fixed_abs, tag = 'smem constant byte address 0x4 - core index']
  #allocation1 [shape = 'u32[144,128]{1,0:T(1,128)}', space=vmem, size = 0x12000, scoped, tag = 'internal scratch']
  #allocation2 [shape = 'f32[128,8]{1,0:T(8,128)}', space=vmem, size = 0x10000, scoped, tag = 'scratch operand']
  #allocation11 [shape = 's32[]', space=sflag, size = 0x4, offset = 0, fixed_abs, tag = 'sflag constant byte address 0x0 - dummy sync flag']
  %s0 = inlined_call_operand.hbm [shape: f32[64,256], index: 0, kind: input, shape index: {}]
  %s1 = inlined_call_operand.vmem [shape: f32[8,64], index: 1, kind: input, shape index: {}]
  %s2 = inlined_call_operand.vmem [shape: f32[8,1], index: 2, kind: input, shape index: {}]
  %s3 = inlined_call_operand.hbm [shape: bf16[8,256,128], index: 3, kind: input, shape index: {}]
  %s4 = inlined_call_operand.hbm [shape: bf16[256,128], index: 4, kind: output, shape index: {0}]
  %s5 = inlined_call_operand.hbm [shape: f32[8,256], index: 5, kind: output, shape index: {1}]
  %6 = xla_tuple %s4, %s5
  %s7 = sld [smem:[#allocation0]]
  $region69: #{tpu_custom_call.1} parent=0
    _
  %s9 = ssub.s32 1, %s7
  %s10 = scalar_select 0, %s9, %s7
  $region1: #{tpu_custom_call.1} parent=0
    #allocation3 [shape = 'u8[65536]{0}', space=vmem, size = 0x10000, scoped, tag = 'input window, operand 0']
    #allocation4 [shape = 's32[2]{0}', space=sflag, size = 0x8, scoped, tag = 'scoped memory for tpu_custom_call.1']
    #allocation5 [shape = 's32[2]{0}', space=sflag, size = 0x8, scoped, tag = 'scoped memory for tpu_custom_call.1']
    #allocation6 [shape = 'u8[524288]{0}', space=vmem, size = 0x80000, scoped, tag = 'input window, operand 3']
    #allocation7 [shape = 's32[2]{0}', space=sflag, size = 0x8, scoped, tag = 'scoped memory for tpu_custom_call.1']
    #allocation8 [shape = 'u8[65536]{0}', space=vmem, size = 0x10000, scoped, tag = 'output window, operand 0']
    #allocation9 [shape = 'u8[8192]{0}', space=vmem, size = 0x2000, scoped, tag = 'output window, operand 1']
    #allocation10 [shape = 's32[2]{0}', space=sflag, size = 0x8, scoped, tag = 'scoped memory for tpu_custom_call.1']
    %11 = vsyncpa [#allocation4], 0
    %s12 = scalar_lea.sflag [#allocation4], 1
    %13 = vsyncpa %s12, 0
    %14 = vsyncpa [#allocation7], 0
    %s15 = scalar_lea.sflag [#allocation7], 1
    %16 = vsyncpa %s15, 0
    %17 = vsyncpa [#allocation5], 0
    %s18 = scalar_lea.sflag [#allocation5], 1
    %19 = vsyncpa %s18, 0
    %20 = vsyncpa [#allocation10], 0
    %s21 = scalar_lea.sflag [#allocation10], 1
    %22 = vsyncpa %s21, 0
    loop: start=0, step=1, limit=4
    $region2: #{tpu_custom_call.1} parent=1 // loop_pre_header
      _
    $region3: #{tpu_custom_call.1} parent=1 // loop_header
      %s24 = sphi 0, %s28
      %p25 = scmp.ge.s32.totalorder %s24, 4
      %s31 = sphi 0, %s43
      %s32 = sphi 0, %s39
      %s33 = sphi 0, %s31
      %s34 = sphi 0, %s32
      %s35 = sphi 0, %s33
      %s36 = sphi 0, %s34
      %s46 = sphi 0, %s48
      %s49 = sphi 0, %s46
      %s50 = sphi 0, %s49
      %s66 = sphi 0, %s50
      %s70 = sphi 0, %s70
      %s72 = sphi 0, %s70
      %s73 = sphi 0, %s72
      %s87 = sphi 0, %s73
      %s91 = sphi 0, %s91
      %s93 = sphi 0, %s91
      %s94 = sphi 0, %s93
      %s108 = sphi 0, %s94
      %s116 = sphi 0, %s118
      %s119 = sphi 0, %s116
      %s120 = sphi 0, %s119
      %s136 = sphi 0, %s120
      %s144 = sphi 0, %s146
      %s147 = sphi 0, %s144
      %s148 = sphi 0, %s147
      %s164 = sphi 0, %s148
      %s170 = sphi 0, %s172
      %s173 = sphi 0, %s170
      %s174 = sphi 0, %s173
      %s190 = sphi 0, %s174
    $region4: #{tpu_custom_call.1} parent=1 // loop_header_branch
      %27 = sbr.rel (%p25) target = $region8
    $region5: #{tpu_custom_call.1} parent=1 // loop_body
      %s29 = ssub.s32 %s24, 1
      %s30 = ssub.s32 %s24, 2
      %s37 = sadd.s32 1, %s32
      %p38 = scmp.ge.s32.totalorder %s37, 1
      %s39 = scalar_select %p38, 0, %s37
      %s40 = sadd.s32 1, %s31
      %s41 = scalar_select %p38, %s40, %s31
      %p42 = scmp.ge.s32.totalorder %s41, 2
      %s43 = scalar_select %p42, 0, %s41
      %s44 = ssub.s32 %s31, %s43
      %p45 = scmp.eq.s32.totalorder %s44, 0
      %s47 = sadd.s32 %s46, 1
      %s48 = scalar_select %p45, %s46, %s47
      %p51 = pneg %p45
      %p52 = scmp.eq.s32.totalorder %s24, 1
      %p53 = por %p51, %p52
      %p54 = scmp.ne.s32.totalorder %s46, %s49
      %p55 = scmp.eq.s32.totalorder %s24, 0
      %p56 = por %p54, %p55
      %p57 = scmp.ne.s32.totalorder %s46, %s49
      %p58 = scmp.eq.s32.totalorder %s29, 1
      %p59 = por %p57, %p58
      %p60 = scmp.ne.s32.totalorder %s49, %s50
      %p61 = scmp.eq.s32.totalorder %s29, 0
      %p62 = por %p60, %p61
      %p63 = scmp.ne.s32.totalorder %s49, %s50
      %p64 = scmp.eq.s32.totalorder %s30, 1
      %p65 = por %p63, %p64
      %p67 = scmp.ne.s32.totalorder %s50, %s66
      %p68 = scmp.eq.s32.totalorder %s30, 0
      %p69 = por %p67, %p68
      %s71 = sadd.s32 %s70, 1
      %p74 = scmp.eq.s32.totalorder %s24, 1
      %p75 = scmp.ne.s32.totalorder %s70, %s72
      %p76 = scmp.eq.s32.totalorder %s24, 0
      %p77 = por %p75, %p76
      %p78 = scmp.ne.s32.totalorder %s70, %s72
      %p79 = scmp.eq.s32.totalorder %s29, 1
      %p80 = por %p78, %p79
      %p81 = scmp.ne.s32.totalorder %s72, %s73
      %p82 = scmp.eq.s32.totalorder %s29, 0
      %p83 = por %p81, %p82
      %p84 = scmp.ne.s32.totalorder %s72, %s73
      %p85 = scmp.eq.s32.totalorder %s30, 1
      %p86 = por %p84, %p85
      %p88 = scmp.ne.s32.totalorder %s73, %s87
      %p89 = scmp.eq.s32.totalorder %s30, 0
      %p90 = por %p88, %p89
      %s92 = sadd.s32 %s91, 1
      %p95 = scmp.eq.s32.totalorder %s24, 1
      %p96 = scmp.ne.s32.totalorder %s91, %s93
      %p97 = scmp.eq.s32.totalorder %s24, 0
      %p98 = por %p96, %p97
      %p99 = scmp.ne.s32.totalorder %s91, %s93
      %p100 = scmp.eq.s32.totalorder %s29, 1
      %p101 = por %p99, %p100
      %p102 = scmp.ne.s32.totalorder %s93, %s94
      %p103 = scmp.eq.s32.totalorder %s29, 0
      %p104 = por %p102, %p103
      %p105 = scmp.ne.s32.totalorder %s93, %s94
      %p106 = scmp.eq.s32.totalorder %s30, 1
      %p107 = por %p105, %p106
      %p109 = scmp.ne.s32.totalorder %s94, %s108
      %p110 = scmp.eq.s32.totalorder %s30, 0
      %p111 = por %p109, %p110
      %s112 = ssub.s32 %s31, %s43
      %s113 = ssub.s32 %s32, %s39
      %s114 = sor.u32 %s112, %s113
      %p115 = scmp.eq.s32.totalorder %s114, 0
      %s117 = sadd.s32 %s116, 1
      %s118 = scalar_select %p115, %s116, %s117
      %p121 = pneg %p115
      %p122 = scmp.eq.s32.totalorder %s24, 1
      %p123 = por %p121, %p122
      %p124 = scmp.ne.s32.totalorder %s116, %s119
      %p125 = scmp.eq.s32.totalorder %s24, 0
      %p126 = por %p124, %p125
      %p127 = scmp.ne.s32.totalorder %s116, %s119
      %p128 = scmp.eq.s32.totalorder %s29, 1
      %p129 = por %p127, %p128
      %p130 = scmp.ne.s32.totalorder %s119, %s120
      %p131 = scmp.eq.s32.totalorder %s29, 0
      %p132 = por %p130, %p131
      %p133 = scmp.ne.s32.totalorder %s119, %s120
      %p134 = scmp.eq.s32.totalorder %s30, 1
      %p135 = por %p133, %p134
      %p137 = scmp.ne.s32.totalorder %s120, %s136
      %p138 = scmp.eq.s32.totalorder %s30, 0
      %p139 = por %p137, %p138
      %s140 = ssub.s32 %s31, %s43
      %s141 = ssub.s32 %s32, %s39
      %s142 = sor.u32 %s140, %s141
      %p143 = scmp.eq.s32.totalorder %s142, 0
      %s145 = sadd.s32 %s144, 1
      %s146 = scalar_select %p143, %s144, %s145
      %p149 = pneg %p143
      %p150 = scmp.eq.s32.totalorder %s24, 1
      %p151 = por %p149, %p150
      %p152 = scmp.ne.s32.totalorder %s144, %s147
      %p153 = scmp.eq.s32.totalorder %s24, 0
      %p154 = por %p152, %p153
      %p155 = scmp.ne.s32.totalorder %s144, %s147
      %p156 = scmp.eq.s32.totalorder %s29, 1
      %p157 = por %p155, %p156
      %p158 = scmp.ne.s32.totalorder %s147, %s148
      %p159 = scmp.eq.s32.totalorder %s29, 0
      %p160 = por %p158, %p159
      %p161 = scmp.ne.s32.totalorder %s147, %s148
      %p162 = scmp.eq.s32.totalorder %s30, 1
      %p163 = por %p161, %p162
      %p165 = scmp.ne.s32.totalorder %s148, %s164
      %p166 = scmp.eq.s32.totalorder %s30, 0
      %p167 = por %p165, %p166
      %s168 = ssub.s32 %s31, %s43
      %p169 = scmp.eq.s32.totalorder %s168, 0
      %s171 = sadd.s32 %s170, 1
      %s172 = scalar_select %p169, %s170, %s171
      %p175 = pneg %p169
      %p176 = scmp.eq.s32.totalorder %s24, 1
      %p177 = por %p175, %p176
      %p178 = scmp.ne.s32.totalorder %s170, %s173
      %p179 = scmp.eq.s32.totalorder %s24, 0
      %p180 = por %p178, %p179
      %p181 = scmp.ne.s32.totalorder %s170, %s173
      %p182 = scmp.eq.s32.totalorder %s29, 1
      %p183 = por %p181, %p182
      %p184 = scmp.ne.s32.totalorder %s173, %s174
      %p185 = scmp.eq.s32.totalorder %s29, 0
      %p186 = por %p184, %p185
      %p187 = scmp.ne.s32.totalorder %s173, %s174
      %p188 = scmp.eq.s32.totalorder %s30, 1
      %p189 = por %p187, %p188
      %p191 = scmp.ne.s32.totalorder %s174, %s190
      %p192 = scmp.eq.s32.totalorder %s30, 0
      %p193 = por %p191, %p192
      %p194 = scmp.le.s32.totalorder 1, %s24
      %p195 = scmp.lt.s32.totalorder %s24, 3
      %p196 = pnand %p194, %p195
      %p197 = pneg %p196
      // Predicated region
      $region9: #{tpu_custom_call.1} parent=5 // pred_check
        _
      $region10: #{tpu_custom_call.1} parent=5 // pred_check_branch
        %199 = sbr.rel (%p196) target = $region12
      $region11: #{tpu_custom_call.1} parent=5 // pred_region
        %s200 = ssub.s32 %s24, 1
        // Predicated region
        $region13: #{tpu_custom_call.1} parent=11 // pred_check
          %p201 = pneg %p83
        $region14: #{tpu_custom_call.1} parent=11 // pred_check_branch
          %203 = sbr.rel (%p201) target = $region16
        $region15: #{tpu_custom_call.1} parent=11 // pred_region
          _
        $region16: #{tpu_custom_call.1} parent=11 // pred_fallthru
          _
        // Predicated region
        $region17: #{tpu_custom_call.1} parent=11 // pred_check
          %p204 = pneg %p104
        $region18: #{tpu_custom_call.1} parent=11 // pred_check_branch
          %206 = sbr.rel (%p204) target = $region20
        $region19: #{tpu_custom_call.1} parent=11 // pred_region
          _
        $region20: #{tpu_custom_call.1} parent=11 // pred_fallthru
          _
      $region12: #{tpu_custom_call.1} parent=5 // pred_fallthru
        _
      %p207 = scmp.lt.s32.totalorder %s24, 2
      // Predicated region
      $region21: #{tpu_custom_call.1} parent=5 // pred_check
        %p208 = pneg %p207
      $region22: #{tpu_custom_call.1} parent=5 // pred_check_branch
        %210 = sbr.rel (%p208) target = $region24
      $region23: #{tpu_custom_call.1} parent=5 // pred_region
        // Predicated region
        $region25: #{tpu_custom_call.1} parent=23 // pred_check
          %p211 = pneg %p56
        $region26: #{tpu_custom_call.1} parent=23 // pred_check_branch
          %213 = sbr.rel (%p211) target = $region28
        $region27: #{tpu_custom_call.1} parent=23 // pred_region
          %s214 = sand.u32 %s46, 1
          %s215 = scalar_lea.sflag [#allocation4], %s214
          %s216 = sand.u32 %s46, 1
          %s217 = smul.addr %s216, 64
          %s218 = scalar_lea.vmem [#allocation3], %s217
          %s220 = ssub.s32 1024, 1024
          %221 = vsyncadd %s215, %s220
          %s222 = smul.addr %s31, 128
          %s223 = scalar_lea.hbm %s0, %s222
          %s224 = sshll.u32 %s218, 4
          %s225 = int_to_ptr.vmem [resolvable:$true] %s224
          %230 = dma.hbm_to_vmem [thread:$0]  %s223, 1024, %s225, %s215, 256, 128, 8
        $region28: #{tpu_custom_call.1} parent=23 // pred_fallthru
          _
        // Predicated region
        $region29: #{tpu_custom_call.1} parent=23 // pred_check
          %p231 = pneg %p126
        $region30: #{tpu_custom_call.1} parent=23 // pred_check_branch
          %233 = sbr.rel (%p231) target = $region32
        $region31: #{tpu_custom_call.1} parent=23 // pred_region
          #allocation12 [shape = 'u32[6]{0}', space=smem, size = 0x18, scoped, tag = 'DMA stride descriptor']
          %s234 = sand.u32 %s116, 1
          %s235 = scalar_lea.sflag [#allocation7], %s234
          %s236 = sand.u32 %s116, 1
          %s237 = smul.addr %s236, 512
          %s238 = scalar_lea.vmem [#allocation6], %s237
          %s239 = smul.u32 16, %s31
          %s241 = ssub.s32 8192, 8192
          %242 = vsyncadd %s235, %s241
          %s243 = sadd.s32 %s32, %s239
          %s244 = smul.addr %s243, 64
          %s245 = scalar_lea.hbm %s3, %s244
          %s247 = sshll.u32 1, 14
          %s248 = sxor.u32 4294967295, %s247
          %s250 = sld [smem:[#allocation0]]
          %s251 = sadd.s32 2, %s250
          %s253 = sshll.u32 7, 26
          %s254 = sxor.u32 4294967295, %s253
          %s255 = sand.u32 0, %s254
          %s256 = sshll.u32 %s251, 26
          %s257 = sor.u32 %s255, %s256
          %s258 = sshll.u32 %s238, 4
          %s259 = int_to_ptr.vmem [resolvable:$true] %s258
          %265 = sst [smem:[#allocation12]] 2048
          %s266 = scalar_lea.smem [#allocation12], 1
          %267 = sst [smem:[%s266]] 1024
          %s268 = scalar_lea.smem [#allocation12], 2
          %269 = sst [smem:[%s268]] 16
          %s270 = scalar_lea.smem [#allocation12], 3
          %271 = sst [smem:[%s270]] 64
          %s272 = scalar_lea.smem [#allocation12], 4
          %273 = sst [smem:[%s272]] 64
          %s274 = scalar_lea.smem [#allocation12], 5
          %275 = sst [smem:[%s274]] 4
          %277 = dma.general %s245, 8192, %s259, %s235, 131072, [#allocation12], %s257, 0
        $region32: #{tpu_custom_call.1} parent=23 // pred_fallthru
          _
      $region24: #{tpu_custom_call.1} parent=5 // pred_fallthru
        _
      %p278 = scmp.le.s32.totalorder 1, %s24
      %p279 = scmp.lt.s32.totalorder %s24, 3
      %p280 = pnand %p278, %p279
      %p281 = pneg %p280
      // Predicated region
      $region33: #{tpu_custom_call.1} parent=5 // pred_check
        _
      $region34: #{tpu_custom_call.1} parent=5 // pred_check_branch
        %283 = sbr.rel (%p280) target = $region36
      $region35: #{tpu_custom_call.1} parent=5 // pred_region
        %s284 = ssub.s32 %s24, 1
        %s285 = sand.u32 %s49, 1
        %s286 = scalar_lea.sflag [#allocation4], %s285
        %s287 = sand.u32 %s49, 1
        %s288 = smul.addr %s287, 64
        %s289 = scalar_lea.vmem [#allocation3], %s288
        // Predicated region
        $region37: #{tpu_custom_call.1} parent=35 // pred_check
          %p290 = pneg %p62
        $region38: #{tpu_custom_call.1} parent=35 // pred_check_branch
          %292 = sbr.rel (%p290) target = $region40
        $region39: #{tpu_custom_call.1} parent=35 // pred_region
          %293 = dma.done %s286, 1024
        $region40: #{tpu_custom_call.1} parent=35 // pred_fallthru
          _
        %s294 = sand.u32 %s119, 1
        %s295 = scalar_lea.sflag [#allocation7], %s294
        %s296 = sand.u32 %s119, 1
        %s297 = smul.addr %s296, 512
        %s298 = scalar_lea.vmem [#allocation6], %s297
        // Predicated region
        $region41: #{tpu_custom_call.1} parent=35 // pred_check
          %p299 = pneg %p132
        $region42: #{tpu_custom_call.1} parent=35 // pred_check_branch
          %301 = sbr.rel (%p299) target = $region44
        $region43: #{tpu_custom_call.1} parent=35 // pred_region
          %302 = dma.done %s295, 8192
        $region44: #{tpu_custom_call.1} parent=35 // pred_fallthru
          _
        %s303 = sand.u32 %s49, 1
        %s304 = scalar_lea.sflag [#allocation4], %s303
        %s305 = sand.u32 %s49, 1
        %s306 = smul.addr %s305, 64
        %s307 = scalar_lea.vmem [#allocation3], %s306
        %p308 = pneg %p62
        %p309 = pneg %p59
        %p310 = pneg %p83
        %p311 = pneg %p80
        %p312 = pneg %p104
        %p313 = pneg %p101
        %s314 = sand.u32 %s119, 1
        %s315 = scalar_lea.sflag [#allocation7], %s314
        %s316 = sand.u32 %s119, 1
        %s317 = smul.addr %s316, 512
        %s318 = scalar_lea.vmem [#allocation6], %s317
        %p319 = pneg %p132
        %p320 = pneg %p129
        %p321 = pneg %p160
        %p322 = pneg %p157
        %s323 = sand.u32 %s147, 1
        %s324 = scalar_lea.sflag [#allocation5], %s323
        %s325 = sand.u32 %s147, 1
        %s326 = smul.addr %s325, 64
        %s327 = scalar_lea.vmem [#allocation8], %s326
        %p328 = pneg %p186
        %p329 = pneg %p183
        %s330 = sand.u32 %s173, 1
        %s331 = scalar_lea.sflag [#allocation10], %s330
        %s332 = sand.u32 %s173, 1
        %s333 = smul.addr %s332, 8
        %s334 = scalar_lea.vmem [#allocation9], %s333
        %s335 = smul.u32 16, %s33
        %s336 = smul.u32 16, %s33
        %p337 = scmp.eq.s32.totalorder %s34, 0
        // Predicated region
        $region45: #{tpu_custom_call.1} parent=35 // pred_check
          %p338 = pneg %p337
        $region46: #{tpu_custom_call.1} parent=35 // pred_check_branch
          %340 = sbr.rel (%p338) target = $region48
        $region47: #{tpu_custom_call.1} parent=35 // pred_region
          %v341 = vld [vmem:[%s289] sm:$0xff]
          %v342 = vld [vmem:[%s289 + $0x8] sm:$0xff]
          %v343 = vld [vmem:[%s289 + $0x10] sm:$0xff]
          %v344 = vld [vmem:[%s289 + $0x18] sm:$0xff]
          %v345 = vld [vmem:[%s289 + $0x20] sm:$0xff]
          %v346 = vld [vmem:[%s289 + $0x28] sm:$0xff]
          %v347 = vld [vmem:[%s289 + $0x30] sm:$0xff]
          %v348 = vld [vmem:[%s289 + $0x38] sm:$0xff]
          %v349 = vld [vmem:[%s1] sm:$0xff]
          %v350 = vld [vmem:[%s2] sm:$0xff]
          %352 = vset.pattern.permute.xlu0 0
          %353 = vperm.xlu0 %352, %v350
          %v354 = vpop.permute.xlu0 %353
          %vm356 = vcmask 523264
          %v358 = vsel %vm356, %v349, 0
          %360 = vmatprep.subr.mxu0 0.0
          %361 = vmatpush1.msra.mxu0 0.0
          %362 = vmatprep.subr.mxu0 0.0
          %363 = vmatpush1.msra.mxu0 0.0
          %364 = vmatprep.subr.mxu0 0.0
          %365 = vmatpush1.msra.mxu0 0.0
          %366 = vmatprep.subr.mxu0 0.0
          %367 = vmatpush1.msra.mxu0 0.0
          %368 = vmatprep.subr.mxu0 0.0
          %369 = vmatpush1.msra.mxu0 0.0
          %370 = vmatprep.subr.mxu0 0.0
          %371 = vmatpush1.msra.mxu0 0.0
          %372 = vmatprep.subr.mxu0 0.0
          %373 = vmatpush1.msra.mxu0 0.0
          %374 = vmatprep.subr.mxu0 0.0
          %375 = vmatpush1.msra.mxu0 0.0
          %376 = vmatprep.subr.mxu0 0.0
          %377 = vmatpush1.msra.mxu0 %v348
          %378 = vmatprep.subr.mxu0 0.0
          %379 = vmatpush1.msra.mxu0 %v347
          %380 = vmatprep.subr.mxu0 0.0
          %381 = vmatpush1.msra.mxu0 %v346
          %382 = vmatprep.subr.mxu0 0.0
          %383 = vmatpush1.msra.mxu0 %v345
          %384 = vmatprep.subr.mxu0 0.0
          %385 = vmatpush1.msra.mxu0 %v344
          %386 = vmatprep.subr.mxu0 0.0
          %387 = vmatpush1.msra.mxu0 %v343
          %388 = vmatprep.subr.mxu0 0.0
          %389 = vmatpush1.msra.mxu0 %v342
          %390 = vmatprep.subr.mxu0 0.0
          %391 = vmatpush1.msra.mxu0 %v341
          %392 = vmatprep.subr.mxu0 0.0
          %393 = vmatpush2.msra.mxu0 0.0
          %394 = vmatprep.subr.mxu0 0.0
          %395 = vmatpush2.msra.mxu0 0.0
          %396 = vmatprep.subr.mxu0 0.0
          %397 = vmatpush2.msra.mxu0 0.0
          %398 = vmatprep.subr.mxu0 0.0
          %399 = vmatpush2.msra.mxu0 0.0
          %400 = vmatprep.subr.mxu0 0.0
          %401 = vmatpush2.msra.mxu0 0.0
          %402 = vmatprep.subr.mxu0 0.0
          %403 = vmatpush2.msra.mxu0 0.0
          %404 = vmatprep.subr.mxu0 0.0
          %405 = vmatpush2.msra.mxu0 0.0
          %406 = vmatprep.subr.mxu0 0.0
          %407 = vmatpush2.msra.mxu0 0.0
          %408 = vmatprep.subr.mxu0 0.0
          %409 = vmatpush2.msra.mxu0 0.0
          %410 = vmatprep.subr.mxu0 0.0
          %411 = vmatpush2.msra.mxu0 0.0
          %412 = vmatprep.subr.mxu0 0.0
          %413 = vmatpush2.msra.mxu0 0.0
          %414 = vmatprep.subr.mxu0 0.0
          %415 = vmatpush2.msra.mxu0 0.0
          %416 = vmatprep.subr.mxu0 0.0
          %417 = vmatpush2.msra.mxu0 0.0
          %418 = vmatprep.subr.mxu0 0.0
          %419 = vmatpush2.msra.mxu0 0.0
          %420 = vmatprep.subr.mxu0 0.0
          %421 = vmatpush2.msra.mxu0 0.0
          %422 = vmatprep.subr.mxu0 0.0
          %423 = vmatpush2.msra.mxu0 0.0
          %424 = vmatprep.mubr.f32.mxu0 0.0
          %425 = vmatmul.mubr.f32.gmra.mxu0 %v358
          %v426 = vpop.f32.mrf.mxu0
          %v427 = vadd.f32 %v354, %v426
          %v428 = vpop.f32.mrf.mxu0
          %429 = vdwg.mxu0
          %v430 = vrot.slane %v427, 4
          %v431 = vmax.f32 %v427, %v430
          %v432 = vrot.slane %v431, 2
          %v433 = vmax.f32 %v431, %v432
          %v434 = vrot.slane %v433, 1
          %v435 = vmax.f32 %v433, %v434
          %v436 = vsub.f32 %v427, %v435
          %v437 = vmul.f32 %v436, 1.442695
          %v438 = vpow.pop %v437
          %v439 = vrot.slane %v438, 4
          %v440 = vadd.f32 %v438, %v439
          %v441 = vrot.slane %v440, 2
          %v442 = vadd.f32 %v440, %v441
          %v443 = vrot.slane %v442, 1
          %v444 = vadd.f32 %v442, %v443
          %v445 = vrcp.pop %v444
          %v446 = vmul.f32 %v438, %v445
          %v447 = vlaneseq
          %v448 = vshrl.u32 %v447, 7
          %vm449 = vcmp.ge.f32.partialorder %v427, %v435
          %v450 = vsel %vm449, %v448, 8
          %v451 = vrot.slane %v450, 4
          %vm452 = vcmp.lt.s32.totalorder %v450, %v451
          %v453 = vsel %vm452, %v450, %v451
          %v454 = vrot.slane %v453, 2
          %vm455 = vcmp.lt.s32.totalorder %v453, %v454
          %v456 = vsel %vm455, %v453, %v454
          %v457 = vrot.slane %v456, 1
          %vm458 = vcmp.lt.s32.totalorder %v456, %v457
          %v459 = vsel %vm458, %v456, %v457
          %vm460 = vcmp.eq.s32.totalorder %v448, %v459
          %v461 = vsel %vm460, -1e+30, %v427
          %v462 = vrot.slane %v461, 4
          %v463 = vmax.f32 %v461, %v462
          %v464 = vrot.slane %v463, 2
          %v465 = vmax.f32 %v463, %v464
          %v466 = vrot.slane %v465, 1
          %v467 = vmax.f32 %v465, %v466
          %vm468 = vcmp.ge.f32.partialorder %v461, %v467
          %v469 = vsel %vm468, %v448, 8
          %v470 = vrot.slane %v469, 4
          %vm471 = vcmp.lt.s32.totalorder %v469, %v470
          %v472 = vsel %vm471, %v469, %v470
          %v473 = vrot.slane %v472, 2
          %vm474 = vcmp.lt.s32.totalorder %v472, %v473
          %v475 = vsel %vm474, %v472, %v473
          %v476 = vrot.slane %v475, 1
          %vm477 = vcmp.lt.s32.totalorder %v475, %v476
          %v478 = vsel %vm477, %v475, %v476
          %vm479 = vcmp.eq.s32.totalorder %v448, %v478
          %vm480 = vmor %vm460, %vm479
          %v481 = vadd.f32 %v446, 1e-10
          %v482 = vmul.f32 %v481, 2.0
          %v483 = vmax.f32 %v482, 1e-10
          %v484 = vlog2.pop %v483
          %v485 = vmul.f32 %v484, 0.6931472
          %v486 = vsub.f32 %v427, %v485
          %v487 = vsel %vm480, %v486, -1e+30
          %v488 = vrot.slane %v487, 4
          %v489 = vmax.f32 %v487, %v488
          %v490 = vrot.slane %v489, 2
          %v491 = vmax.f32 %v489, %v490
          %v492 = vrot.slane %v491, 1
          %v493 = vmax.f32 %v491, %v492
          %v494 = vsub.f32 %v487, %v493
          %v495 = vmul.f32 %v494, 1.442695
          %v496 = vpow.pop %v495
          %v497 = vsel %vm480, %v496, 0.0
          %v498 = vrot.slane %v497, 4
          %v499 = vadd.f32 %v497, %v498
          %v500 = vrot.slane %v499, 2
          %v501 = vadd.f32 %v499, %v500
          %v502 = vrot.slane %v501, 1
          %v503 = vadd.f32 %v501, %v502
          %v504 = vrcp.pop %v503
          %v505 = vmul.f32 %v497, %v504
          %506 = vst [vmem:[%s334] sm:$0xff] %v505
          %507 = vxpose.xlu0.b32.start [1/16] %v505, 128
          %508 = vxpose.xlu0.b32.cont [2/16] 0.0, 128
          %509 = vxpose.xlu0.b32.cont [3/16] 0.0, 128
          %510 = vxpose.xlu0.b32.cont [4/16] 0.0, 128
          %511 = vxpose.xlu0.b32.cont [5/16] 0.0, 128
          %512 = vxpose.xlu0.b32.cont [6/16] 0.0, 128
          %513 = vxpose.xlu0.b32.cont [7/16] 0.0, 128
          %514 = vxpose.xlu0.b32.cont [8/16] 0.0, 128
          %515 = vxpose.xlu0.b32.cont [9/16] 0.0, 128
          %516 = vxpose.xlu0.b32.cont [10/16] 0.0, 128
          %517 = vxpose.xlu0.b32.cont [11/16] 0.0, 128
          %518 = vxpose.xlu0.b32.cont [12/16] 0.0, 128
          %519 = vxpose.xlu0.b32.cont [13/16] 0.0, 128
          %520 = vxpose.xlu0.b32.cont [14/16] 0.0, 128
          %521 = vxpose.xlu0.b32.cont [15/16] 0.0, 128
          %522 = vxpose.xlu0.b32.end [16/16] 0.0, 128
          %v523 = vpop.trf.xlu0
          %v524 = vpop.trf.xlu0
          %v525 = vpop.trf.xlu0
          %v526 = vpop.trf.xlu0
          %v527 = vpop.trf.xlu0
          %v528 = vpop.trf.xlu0
          %v529 = vpop.trf.xlu0
          %v530 = vpop.trf.xlu0
          %v531 = vpop.trf.xlu0
          %v532 = vpop.trf.xlu0
          %v533 = vpop.trf.xlu0
          %v534 = vpop.trf.xlu0
          %v535 = vpop.trf.xlu0
          %v536 = vpop.trf.xlu0
          %v537 = vpop.trf.xlu0
          %v538 = vpop.trf.xlu0
          %vm539 = vcmask 64512
          %540 = vst.msk [vmem:[#allocation2] sm:$0xff] %vm539, %v523
          %541 = vst.msk [vmem:[#allocation2 + $0x8] sm:$0xff] %vm539, %v524
          %542 = vst.msk [vmem:[#allocation2 + $0x10] sm:$0xff] %vm539, %v525
          %543 = vst.msk [vmem:[#allocation2 + $0x18] sm:$0xff] %vm539, %v526
          %544 = vst.msk [vmem:[#allocation2 + $0x20] sm:$0xff] %vm539, %v527
          %545 = vst.msk [vmem:[#allocation2 + $0x28] sm:$0xff] %vm539, %v528
          %546 = vst.msk [vmem:[#allocation2 + $0x30] sm:$0xff] %vm539, %v529
          %547 = vst.msk [vmem:[#allocation2 + $0x38] sm:$0xff] %vm539, %v530
          %548 = vst.msk [vmem:[#allocation2 + $0x40] sm:$0xff] %vm539, %v531
          %549 = vst.msk [vmem:[#allocation2 + $0x48] sm:$0xff] %vm539, %v532
          %550 = vst.msk [vmem:[#allocation2 + $0x50] sm:$0xff] %vm539, %v533
          %551 = vst.msk [vmem:[#allocation2 + $0x58] sm:$0xff] %vm539, %v534
          %552 = vst.msk [vmem:[#allocation2 + $0x60] sm:$0xff] %vm539, %v535
          %553 = vst.msk [vmem:[#allocation2 + $0x68] sm:$0xff] %vm539, %v536
          %554 = vst.msk [vmem:[#allocation2 + $0x70] sm:$0xff] %vm539, %v537
          %555 = vst.msk [vmem:[#allocation2 + $0x78] sm:$0xff] %vm539, %v538
        $region48: #{tpu_custom_call.1} parent=35 // pred_fallthru
          _
        %v556 = vld [vmem:[#allocation2] sm:$0xff]
        %v557 = vld [vmem:[#allocation2 + $0x8] sm:$0xff]
        %v558 = vld [vmem:[#allocation2 + $0x10] sm:$0xff]
        %v559 = vld [vmem:[#allocation2 + $0x18] sm:$0xff]
        %v560 = vld [vmem:[#allocation2 + $0x20] sm:$0xff]
        %v561 = vld [vmem:[#allocation2 + $0x28] sm:$0xff]
        %v562 = vld [vmem:[#allocation2 + $0x30] sm:$0xff]
        %v563 = vld [vmem:[#allocation2 + $0x38] sm:$0xff]
        %v564 = vld [vmem:[#allocation2 + $0x40] sm:$0xff]
        %v565 = vld [vmem:[#allocation2 + $0x48] sm:$0xff]
        %v566 = vld [vmem:[#allocation2 + $0x50] sm:$0xff]
        %v567 = vld [vmem:[#allocation2 + $0x58] sm:$0xff]
        %v568 = vld [vmem:[#allocation2 + $0x60] sm:$0xff]
        %v569 = vld [vmem:[#allocation2 + $0x68] sm:$0xff]
        %v570 = vld [vmem:[#allocation2 + $0x70] sm:$0xff]
        %v571 = vld [vmem:[#allocation2 + $0x78] sm:$0xff]
        %v572 = vld [vmem:[%s298] sm:$0xf]
        %v573 = vld [vmem:[%s298 + $0x4] sm:$0xf]
        %v574 = vld [vmem:[%s298 + $0x8] sm:$0xf]
        %v575 = vld [vmem:[%s298 + $0xc] sm:$0xf]
        %v576 = vld [vmem:[%s298 + $0x10] sm:$0xf]
        %v577 = vld [vmem:[%s298 + $0x14] sm:$0xf]
        %v578 = vld [vmem:[%s298 + $0x18] sm:$0xf]
        %v579 = vld [vmem:[%s298 + $0x1c] sm:$0xf]
        %v580 = vld [vmem:[%s298 + $0x20] sm:$0xf]
        %v581 = vld [vmem:[%s298 + $0x24] sm:$0xf]
        %v582 = vld [vmem:[%s298 + $0x28] sm:$0xf]
        %v583 = vld [vmem:[%s298 + $0x2c] sm:$0xf]
        %v584 = vld [vmem:[%s298 + $0x30] sm:$0xf]
        %v585 = vld [vmem:[%s298 + $0x34] sm:$0xf]
        %v586 = vld [vmem:[%s298 + $0x38] sm:$0xf]
        %v587 = vld [vmem:[%s298 + $0x3c] sm:$0xf]
        %v588 = vunpack.c.l.bf16 %v572
        %v589 = vunpack.c.l.bf16 %v573
        %v590 = vunpack.c.l.bf16 %v574
        %v591 = vunpack.c.l.bf16 %v575
        %v592 = vunpack.c.l.bf16 %v576
        %v593 = vunpack.c.l.bf16 %v577
        %v594 = vunpack.c.l.bf16 %v578
        %v595 = vunpack.c.l.bf16 %v579
        %v596 = vunpack.c.l.bf16 %v580
        %v597 = vunpack.c.l.bf16 %v581
        %v598 = vunpack.c.l.bf16 %v582
        %v599 = vunpack.c.l.bf16 %v583
        %v600 = vunpack.c.l.bf16 %v584
        %v601 = vunpack.c.l.bf16 %v585
        %v602 = vunpack.c.l.bf16 %v586
        %v603 = vunpack.c.l.bf16 %v587
        %605 = vset.pattern.permute.xlu0 0
        %606 = vperm.xlu0 %605, %v556
        %v607 = vpop.permute.xlu0 %606
        %610 = vset.pattern.permute.xlu0 0
        %611 = vperm.xlu0 %610, %v557
        %v612 = vpop.permute.xlu0 %611
        %615 = vset.pattern.permute.xlu0 0
        %616 = vperm.xlu0 %615, %v558
        %v617 = vpop.permute.xlu0 %616
        %620 = vset.pattern.permute.xlu0 0
        %621 = vperm.xlu0 %620, %v559
        %v622 = vpop.permute.xlu0 %621
        %625 = vset.pattern.permute.xlu0 0
        %626 = vperm.xlu0 %625, %v560
        %v627 = vpop.permute.xlu0 %626
        %630 = vset.pattern.permute.xlu0 0
        %631 = vperm.xlu0 %630, %v561
        %v632 = vpop.permute.xlu0 %631
        %635 = vset.pattern.permute.xlu0 0
        %636 = vperm.xlu0 %635, %v562
        %v637 = vpop.permute.xlu0 %636
        %640 = vset.pattern.permute.xlu0 0
        %641 = vperm.xlu0 %640, %v563
        %v642 = vpop.permute.xlu0 %641
        %645 = vset.pattern.permute.xlu0 0
        %646 = vperm.xlu0 %645, %v564
        %v647 = vpop.permute.xlu0 %646
        %650 = vset.pattern.permute.xlu0 0
        %651 = vperm.xlu0 %650, %v565
        %v652 = vpop.permute.xlu0 %651
        %655 = vset.pattern.permute.xlu0 0
        %656 = vperm.xlu0 %655, %v566
        %v657 = vpop.permute.xlu0 %656
        %660 = vset.pattern.permute.xlu0 0
        %661 = vperm.xlu0 %660, %v567
        %v662 = vpop.permute.xlu0 %661
        %665 = vset.pattern.permute.xlu0 0
        %666 = vperm.xlu0 %665, %v568
        %v667 = vpop.permute.xlu0 %666
        %670 = vset.pattern.permute.xlu0 0
        %671 = vperm.xlu0 %670, %v569
        %v672 = vpop.permute.xlu0 %671
        %675 = vset.pattern.permute.xlu0 0
        %676 = vperm.xlu0 %675, %v570
        %v677 = vpop.permute.xlu0 %676
        %680 = vset.pattern.permute.xlu0 0
        %681 = vperm.xlu0 %680, %v571
        %v682 = vpop.permute.xlu0 %681
        %v684 = vmul.f32 %v607, %v588
        %v685 = vmul.f32 %v612, %v589
        %v686 = vmul.f32 %v617, %v590
        %v687 = vmul.f32 %v622, %v591
        %v688 = vmul.f32 %v627, %v592
        %v689 = vmul.f32 %v632, %v593
        %v690 = vmul.f32 %v637, %v594
        %v691 = vmul.f32 %v642, %v595
        %v692 = vmul.f32 %v647, %v596
        %v693 = vmul.f32 %v652, %v597
        %v694 = vmul.f32 %v657, %v598
        %v695 = vmul.f32 %v662, %v599
        %v696 = vmul.f32 %v667, %v600
        %v697 = vmul.f32 %v672, %v601
        %v698 = vmul.f32 %v677, %v602
        %v699 = vmul.f32 %v682, %v603
        %s700 = scalar_lea.vmem %s298, 64 [#allocation6]
        %v701 = vld [vmem:[%s700] sm:$0xf]
        %v702 = vld [vmem:[%s700 + $0x4] sm:$0xf]
        %v703 = vld [vmem:[%s700 + $0x8] sm:$0xf]
        %v704 = vld [vmem:[%s700 + $0xc] sm:$0xf]
        %v705 = vld [vmem:[%s700 + $0x10] sm:$0xf]
        %v706 = vld [vmem:[%s700 + $0x14] sm:$0xf]
        %v707 = vld [vmem:[%s700 + $0x18] sm:$0xf]
        %v708 = vld [vmem:[%s700 + $0x1c] sm:$0xf]
        %v709 = vld [vmem:[%s700 + $0x20] sm:$0xf]
        %v710 = vld [vmem:[%s700 + $0x24] sm:$0xf]
        %v711 = vld [vmem:[%s700 + $0x28] sm:$0xf]
        %v712 = vld [vmem:[%s700 + $0x2c] sm:$0xf]
        %v713 = vld [vmem:[%s700 + $0x30] sm:$0xf]
        %v714 = vld [vmem:[%s700 + $0x34] sm:$0xf]
        %v715 = vld [vmem:[%s700 + $0x38] sm:$0xf]
        %v716 = vld [vmem:[%s700 + $0x3c] sm:$0xf]
        %v717 = vunpack.c.l.bf16 %v701
        %v718 = vunpack.c.l.bf16 %v702
        %v719 = vunpack.c.l.bf16 %v703
        %v720 = vunpack.c.l.bf16 %v704
        %v721 = vunpack.c.l.bf16 %v705
        %v722 = vunpack.c.l.bf16 %v706
        %v723 = vunpack.c.l.bf16 %v707
        %v724 = vunpack.c.l.bf16 %v708
        %v725 = vunpack.c.l.bf16 %v709
        %v726 = vunpack.c.l.bf16 %v710
        %v727 = vunpack.c.l.bf16 %v711
        %v728 = vunpack.c.l.bf16 %v712
        %v729 = vunpack.c.l.bf16 %v713
        %v730 = vunpack.c.l.bf16 %v714
        %v731 = vunpack.c.l.bf16 %v715
        %v732 = vunpack.c.l.bf16 %v716
        %733 = vset.pattern.permute.xlu0 1
        %734 = vperm.xlu0 %733, %v556
        %v735 = vpop.permute.xlu0 %734
        %737 = vset.pattern.permute.xlu0 1
        %738 = vperm.xlu0 %737, %v557
        %v739 = vpop.permute.xlu0 %738
        %741 = vset.pattern.permute.xlu0 1
        %742 = vperm.xlu0 %741, %v558
        %v743 = vpop.permute.xlu0 %742
        %745 = vset.pattern.permute.xlu0 1
        %746 = vperm.xlu0 %745, %v559
        %v747 = vpop.permute.xlu0 %746
        %749 = vset.pattern.permute.xlu0 1
        %750 = vperm.xlu0 %749, %v560
        %v751 = vpop.permute.xlu0 %750
        %753 = vset.pattern.permute.xlu0 1
        %754 = vperm.xlu0 %753, %v561
        %v755 = vpop.permute.xlu0 %754
        %757 = vset.pattern.permute.xlu0 1
        %758 = vperm.xlu0 %757, %v562
        %v759 = vpop.permute.xlu0 %758
        %761 = vset.pattern.permute.xlu0 1
        %762 = vperm.xlu0 %761, %v563
        %v763 = vpop.permute.xlu0 %762
        %765 = vset.pattern.permute.xlu0 1
        %766 = vperm.xlu0 %765, %v564
        %v767 = vpop.permute.xlu0 %766
        %769 = vset.pattern.permute.xlu0 1
        %770 = vperm.xlu0 %769, %v565
        %v771 = vpop.permute.xlu0 %770
        %773 = vset.pattern.permute.xlu0 1
        %774 = vperm.xlu0 %773, %v566
        %v775 = vpop.permute.xlu0 %774
        %777 = vset.pattern.permute.xlu0 1
        %778 = vperm.xlu0 %777, %v567
        %v779 = vpop.permute.xlu0 %778
        %781 = vset.pattern.permute.xlu0 1
        %782 = vperm.xlu0 %781, %v568
        %v783 = vpop.permute.xlu0 %782
        %785 = vset.pattern.permute.xlu0 1
        %786 = vperm.xlu0 %785, %v569
        %v787 = vpop.permute.xlu0 %786
        %789 = vset.pattern.permute.xlu0 1
        %790 = vperm.xlu0 %789, %v570
        %v791 = vpop.permute.xlu0 %790
        %793 = vset.pattern.permute.xlu0 1
        %794 = vperm.xlu0 %793, %v571
        %v795 = vpop.permute.xlu0 %794
        %v797 = vmul.f32 %v735, %v717
        %v798 = vmul.f32 %v739, %v718
        %v799 = vmul.f32 %v743, %v719
        %v800 = vmul.f32 %v747, %v720
        %v801 = vmul.f32 %v751, %v721
        %v802 = vmul.f32 %v755, %v722
        %v803 = vmul.f32 %v759, %v723
        %v804 = vmul.f32 %v763, %v724
        %v805 = vmul.f32 %v767, %v725
        %v806 = vmul.f32 %v771, %v726
        %v807 = vmul.f32 %v775, %v727
        %v808 = vmul.f32 %v779, %v728
        %v809 = vmul.f32 %v783, %v729
        %v810 = vmul.f32 %v787, %v730
        %v811 = vmul.f32 %v791, %v731
        %v812 = vmul.f32 %v795, %v732
        %v813 = vadd.f32 %v684, %v797
        %v814 = vadd.f32 %v685, %v798
        %v815 = vadd.f32 %v686, %v799
        %v816 = vadd.f32 %v687, %v800
        %v817 = vadd.f32 %v688, %v801
        %v818 = vadd.f32 %v689, %v802
        %v819 = vadd.f32 %v690, %v803
        %v820 = vadd.f32 %v691, %v804
        %v821 = vadd.f32 %v692, %v805
        %v822 = vadd.f32 %v693, %v806
        %v823 = vadd.f32 %v694, %v807
        %v824 = vadd.f32 %v695, %v808
        %v825 = vadd.f32 %v696, %v809
        %v826 = vadd.f32 %v697, %v810
        %v827 = vadd.f32 %v698, %v811
        %v828 = vadd.f32 %v699, %v812
        %s829 = scalar_lea.vmem %s298, 128 [#allocation6]
        %v830 = vld [vmem:[%s829] sm:$0xf]
        %v831 = vld [vmem:[%s829 + $0x4] sm:$0xf]
        %v832 = vld [vmem:[%s829 + $0x8] sm:$0xf]
        %v833 = vld [vmem:[%s829 + $0xc] sm:$0xf]
        %v834 = vld [vmem:[%s829 + $0x10] sm:$0xf]
        %v835 = vld [vmem:[%s829 + $0x14] sm:$0xf]
        %v836 = vld [vmem:[%s829 + $0x18] sm:$0xf]
        %v837 = vld [vmem:[%s829 + $0x1c] sm:$0xf]
        %v838 = vld [vmem:[%s829 + $0x20] sm:$0xf]
        %v839 = vld [vmem:[%s829 + $0x24] sm:$0xf]
        %v840 = vld [vmem:[%s829 + $0x28] sm:$0xf]
        %v841 = vld [vmem:[%s829 + $0x2c] sm:$0xf]
        %v842 = vld [vmem:[%s829 + $0x30] sm:$0xf]
        %v843 = vld [vmem:[%s829 + $0x34] sm:$0xf]
        %v844 = vld [vmem:[%s829 + $0x38] sm:$0xf]
        %v845 = vld [vmem:[%s829 + $0x3c] sm:$0xf]
        %v846 = vunpack.c.l.bf16 %v830
        %v847 = vunpack.c.l.bf16 %v831
        %v848 = vunpack.c.l.bf16 %v832
        %v849 = vunpack.c.l.bf16 %v833
        %v850 = vunpack.c.l.bf16 %v834
        %v851 = vunpack.c.l.bf16 %v835
        %v852 = vunpack.c.l.bf16 %v836
        %v853 = vunpack.c.l.bf16 %v837
        %v854 = vunpack.c.l.bf16 %v838
        %v855 = vunpack.c.l.bf16 %v839
        %v856 = vunpack.c.l.bf16 %v840
        %v857 = vunpack.c.l.bf16 %v841
        %v858 = vunpack.c.l.bf16 %v842
        %v859 = vunpack.c.l.bf16 %v843
        %v860 = vunpack.c.l.bf16 %v844
        %v861 = vunpack.c.l.bf16 %v845
        %862 = vset.pattern.permute.xlu0 2
        %863 = vperm.xlu0 %862, %v556
        %v864 = vpop.permute.xlu0 %863
        %866 = vset.pattern.permute.xlu0 2
        %867 = vperm.xlu0 %866, %v557
        %v868 = vpop.permute.xlu0 %867
        %870 = vset.pattern.permute.xlu0 2
        %871 = vperm.xlu0 %870, %v558
        %v872 = vpop.permute.xlu0 %871
        %874 = vset.pattern.permute.xlu0 2
        %875 = vperm.xlu0 %874, %v559
        %v876 = vpop.permute.xlu0 %875
        %878 = vset.pattern.permute.xlu0 2
        %879 = vperm.xlu0 %878, %v560
        %v880 = vpop.permute.xlu0 %879
        %882 = vset.pattern.permute.xlu0 2
        %883 = vperm.xlu0 %882, %v561
        %v884 = vpop.permute.xlu0 %883
        %886 = vset.pattern.permute.xlu0 2
        %887 = vperm.xlu0 %886, %v562
        %v888 = vpop.permute.xlu0 %887
        %890 = vset.pattern.permute.xlu0 2
        %891 = vperm.xlu0 %890, %v563
        %v892 = vpop.permute.xlu0 %891
        %894 = vset.pattern.permute.xlu0 2
        %895 = vperm.xlu0 %894, %v564
        %v896 = vpop.permute.xlu0 %895
        %898 = vset.pattern.permute.xlu0 2
        %899 = vperm.xlu0 %898, %v565
        %v900 = vpop.permute.xlu0 %899
        %902 = vset.pattern.permute.xlu0 2
        %903 = vperm.xlu0 %902, %v566
        %v904 = vpop.permute.xlu0 %903
        %906 = vset.pattern.permute.xlu0 2
        %907 = vperm.xlu0 %906, %v567
        %v908 = vpop.permute.xlu0 %907
        %910 = vset.pattern.permute.xlu0 2
        %911 = vperm.xlu0 %910, %v568
        %v912 = vpop.permute.xlu0 %911
        %914 = vset.pattern.permute.xlu0 2
        %915 = vperm.xlu0 %914, %v569
        %v916 = vpop.permute.xlu0 %915
        %918 = vset.pattern.permute.xlu0 2
        %919 = vperm.xlu0 %918, %v570
        %v920 = vpop.permute.xlu0 %919
        %922 = vset.pattern.permute.xlu0 2
        %923 = vperm.xlu0 %922, %v571
        %v924 = vpop.permute.xlu0 %923
        %v926 = vmul.f32 %v864, %v846
        %v927 = vmul.f32 %v868, %v847
        %v928 = vmul.f32 %v872, %v848
        %v929 = vmul.f32 %v876, %v849
        %v930 = vmul.f32 %v880, %v850
        %v931 = vmul.f32 %v884, %v851
        %v932 = vmul.f32 %v888, %v852
        %v933 = vmul.f32 %v892, %v853
        %v934 = vmul.f32 %v896, %v854
        %v935 = vmul.f32 %v900, %v855
        %v936 = vmul.f32 %v904, %v856
        %v937 = vmul.f32 %v908, %v857
        %v938 = vmul.f32 %v912, %v858
        %v939 = vmul.f32 %v916, %v859
        %v940 = vmul.f32 %v920, %v860
        %v941 = vmul.f32 %v924, %v861
        %v942 = vadd.f32 %v813, %v926
        %v943 = vadd.f32 %v814, %v927
        %v944 = vadd.f32 %v815, %v928
        %v945 = vadd.f32 %v816, %v929
        %v946 = vadd.f32 %v817, %v930
        %v947 = vadd.f32 %v818, %v931
        %v948 = vadd.f32 %v819, %v932
        %v949 = vadd.f32 %v820, %v933
        %v950 = vadd.f32 %v821, %v934
        %v951 = vadd.f32 %v822, %v935
        %v952 = vadd.f32 %v823, %v936
        %v953 = vadd.f32 %v824, %v937
        %v954 = vadd.f32 %v825, %v938
        %v955 = vadd.f32 %v826, %v939
        %v956 = vadd.f32 %v827, %v940
        %v957 = vadd.f32 %v828, %v941
        %s958 = scalar_lea.vmem %s298, 192 [#allocation6]
        %v959 = vld [vmem:[%s958] sm:$0xf]
        %v960 = vld [vmem:[%s958 + $0x4] sm:$0xf]
        %v961 = vld [vmem:[%s958 + $0x8] sm:$0xf]
        %v962 = vld [vmem:[%s958 + $0xc] sm:$0xf]
        %v963 = vld [vmem:[%s958 + $0x10] sm:$0xf]
        %v964 = vld [vmem:[%s958 + $0x14] sm:$0xf]
        %v965 = vld [vmem:[%s958 + $0x18] sm:$0xf]
        %v966 = vld [vmem:[%s958 + $0x1c] sm:$0xf]
        %v967 = vld [vmem:[%s958 + $0x20] sm:$0xf]
        %v968 = vld [vmem:[%s958 + $0x24] sm:$0xf]
        %v969 = vld [vmem:[%s958 + $0x28] sm:$0xf]
        %v970 = vld [vmem:[%s958 + $0x2c] sm:$0xf]
        %v971 = vld [vmem:[%s958 + $0x30] sm:$0xf]
        %v972 = vld [vmem:[%s958 + $0x34] sm:$0xf]
        %v973 = vld [vmem:[%s958 + $0x38] sm:$0xf]
        %v974 = vld [vmem:[%s958 + $0x3c] sm:$0xf]
        %v975 = vunpack.c.l.bf16 %v959
        %v976 = vunpack.c.l.bf16 %v960
        %v977 = vunpack.c.l.bf16 %v961
        %v978 = vunpack.c.l.bf16 %v962
        %v979 = vunpack.c.l.bf16 %v963
        %v980 = vunpack.c.l.bf16 %v964
        %v981 = vunpack.c.l.bf16 %v965
        %v982 = vunpack.c.l.bf16 %v966
        %v983 = vunpack.c.l.bf16 %v967
        %v984 = vunpack.c.l.bf16 %v968
        %v985 = vunpack.c.l.bf16 %v969
        %v986 = vunpack.c.l.bf16 %v970
        %v987 = vunpack.c.l.bf16 %v971
        %v988 = vunpack.c.l.bf16 %v972
        %v989 = vunpack.c.l.bf16 %v973
        %v990 = vunpack.c.l.bf16 %v974
        %991 = vset.pattern.permute.xlu0 3
        %992 = vperm.xlu0 %991, %v556
        %v993 = vpop.permute.xlu0 %992
        %995 = vset.pattern.permute.xlu0 3
        %996 = vperm.xlu0 %995, %v557
        %v997 = vpop.permute.xlu0 %996
        %999 = vset.pattern.permute.xlu0 3
        %1000 = vperm.xlu0 %999, %v558
        %v1001 = vpop.permute.xlu0 %1000
        %1003 = vset.pattern.permute.xlu0 3
        %1004 = vperm.xlu0 %1003, %v559
        %v1005 = vpop.permute.xlu0 %1004
        %1007 = vset.pattern.permute.xlu0 3
        %1008 = vperm.xlu0 %1007, %v560
        %v1009 = vpop.permute.xlu0 %1008
        %1011 = vset.pattern.permute.xlu0 3
        %1012 = vperm.xlu0 %1011, %v561
        %v1013 = vpop.permute.xlu0 %1012
        %1015 = vset.pattern.permute.xlu0 3
        %1016 = vperm.xlu0 %1015, %v562
        %v1017 = vpop.permute.xlu0 %1016
        %1019 = vset.pattern.permute.xlu0 3
        %1020 = vperm.xlu0 %1019, %v563
        %v1021 = vpop.permute.xlu0 %1020
        %1023 = vset.pattern.permute.xlu0 3
        %1024 = vperm.xlu0 %1023, %v564
        %v1025 = vpop.permute.xlu0 %1024
        %1027 = vset.pattern.permute.xlu0 3
        %1028 = vperm.xlu0 %1027, %v565
        %v1029 = vpop.permute.xlu0 %1028
        %1031 = vset.pattern.permute.xlu0 3
        %1032 = vperm.xlu0 %1031, %v566
        %v1033 = vpop.permute.xlu0 %1032
        %1035 = vset.pattern.permute.xlu0 3
        %1036 = vperm.xlu0 %1035, %v567
        %v1037 = vpop.permute.xlu0 %1036
        %1039 = vset.pattern.permute.xlu0 3
        %1040 = vperm.xlu0 %1039, %v568
        %v1041 = vpop.permute.xlu0 %1040
        %1043 = vset.pattern.permute.xlu0 3
        %1044 = vperm.xlu0 %1043, %v569
        %v1045 = vpop.permute.xlu0 %1044
        %1047 = vset.pattern.permute.xlu0 3
        %1048 = vperm.xlu0 %1047, %v570
        %v1049 = vpop.permute.xlu0 %1048
        %1051 = vset.pattern.permute.xlu0 3
        %1052 = vperm.xlu0 %1051, %v571
        %v1053 = vpop.permute.xlu0 %1052
        %v1055 = vmul.f32 %v993, %v975
        %v1056 = vmul.f32 %v997, %v976
        %v1057 = vmul.f32 %v1001, %v977
        %v1058 = vmul.f32 %v1005, %v978
        %v1059 = vmul.f32 %v1009, %v979
        %v1060 = vmul.f32 %v1013, %v980
        %v1061 = vmul.f32 %v1017, %v981
        %v1062 = vmul.f32 %v1021, %v982
        %v1063 = vmul.f32 %v1025, %v983
        %v1064 = vmul.f32 %v1029, %v984
        %v1065 = vmul.f32 %v1033, %v985
        %v1066 = vmul.f32 %v1037, %v986
        %v1067 = vmul.f32 %v1041, %v987
        %v1068 = vmul.f32 %v1045, %v988
        %v1069 = vmul.f32 %v1049, %v989
        %v1070 = vmul.f32 %v1053, %v990
        %v1071 = vadd.f32 %v942, %v1055
        %v1072 = vadd.f32 %v943, %v1056
        %v1073 = vadd.f32 %v944, %v1057
        %v1074 = vadd.f32 %v945, %v1058
        %v1075 = vadd.f32 %v946, %v1059
        %v1076 = vadd.f32 %v947, %v1060
        %v1077 = vadd.f32 %v948, %v1061
        %v1078 = vadd.f32 %v949, %v1062
        %v1079 = vadd.f32 %v950, %v1063
        %v1080 = vadd.f32 %v951, %v1064
        %v1081 = vadd.f32 %v952, %v1065
        %v1082 = vadd.f32 %v953, %v1066
        %v1083 = vadd.f32 %v954, %v1067
        %v1084 = vadd.f32 %v955, %v1068
        %v1085 = vadd.f32 %v956, %v1069
        %v1086 = vadd.f32 %v957, %v1070
        %s1087 = scalar_lea.vmem %s298, 256 [#allocation6]
        %v1088 = vld [vmem:[%s1087] sm:$0xf]
        %v1089 = vld [vmem:[%s1087 + $0x4] sm:$0xf]
        %v1090 = vld [vmem:[%s1087 + $0x8] sm:$0xf]
        %v1091 = vld [vmem:[%s1087 + $0xc] sm:$0xf]
        %v1092 = vld [vmem:[%s1087 + $0x10] sm:$0xf]
        %v1093 = vld [vmem:[%s1087 + $0x14] sm:$0xf]
        %v1094 = vld [vmem:[%s1087 + $0x18] sm:$0xf]
        %v1095 = vld [vmem:[%s1087 + $0x1c] sm:$0xf]
        %v1096 = vld [vmem:[%s1087 + $0x20] sm:$0xf]
        %v1097 = vld [vmem:[%s1087 + $0x24] sm:$0xf]
        %v1098 = vld [vmem:[%s1087 + $0x28] sm:$0xf]
        %v1099 = vld [vmem:[%s1087 + $0x2c] sm:$0xf]
        %v1100 = vld [vmem:[%s1087 + $0x30] sm:$0xf]
        %v1101 = vld [vmem:[%s1087 + $0x34] sm:$0xf]
        %v1102 = vld [vmem:[%s1087 + $0x38] sm:$0xf]
        %v1103 = vld [vmem:[%s1087 + $0x3c] sm:$0xf]
        %v1104 = vunpack.c.l.bf16 %v1088
        %v1105 = vunpack.c.l.bf16 %v1089
        %v1106 = vunpack.c.l.bf16 %v1090
        %v1107 = vunpack.c.l.bf16 %v1091
        %v1108 = vunpack.c.l.bf16 %v1092
        %v1109 = vunpack.c.l.bf16 %v1093
        %v1110 = vunpack.c.l.bf16 %v1094
        %v1111 = vunpack.c.l.bf16 %v1095
        %v1112 = vunpack.c.l.bf16 %v1096
        %v1113 = vunpack.c.l.bf16 %v1097
        %v1114 = vunpack.c.l.bf16 %v1098
        %v1115 = vunpack.c.l.bf16 %v1099
        %v1116 = vunpack.c.l.bf16 %v1100
        %v1117 = vunpack.c.l.bf16 %v1101
        %v1118 = vunpack.c.l.bf16 %v1102
        %v1119 = vunpack.c.l.bf16 %v1103
        %1120 = vset.pattern.permute.xlu0 4
        %1121 = vperm.xlu0 %1120, %v556
        %v1122 = vpop.permute.xlu0 %1121
        %1124 = vset.pattern.permute.xlu0 4
        %1125 = vperm.xlu0 %1124, %v557
        %v1126 = vpop.permute.xlu0 %1125
        %1128 = vset.pattern.permute.xlu0 4
        %1129 = vperm.xlu0 %1128, %v558
        %v1130 = vpop.permute.xlu0 %1129
        %1132 = vset.pattern.permute.xlu0 4
        %1133 = vperm.xlu0 %1132, %v559
        %v1134 = vpop.permute.xlu0 %1133
        %1136 = vset.pattern.permute.xlu0 4
        %1137 = vperm.xlu0 %1136, %v560
        %v1138 = vpop.permute.xlu0 %1137
        %1140 = vset.pattern.permute.xlu0 4
        %1141 = vperm.xlu0 %1140, %v561
        %v1142 = vpop.permute.xlu0 %1141
        %1144 = vset.pattern.permute.xlu0 4
        %1145 = vperm.xlu0 %1144, %v562
        %v1146 = vpop.permute.xlu0 %1145
        %1148 = vset.pattern.permute.xlu0 4
        %1149 = vperm.xlu0 %1148, %v563
        %v1150 = vpop.permute.xlu0 %1149
        %1152 = vset.pattern.permute.xlu0 4
        %1153 = vperm.xlu0 %1152, %v564
        %v1154 = vpop.permute.xlu0 %1153
        %1156 = vset.pattern.permute.xlu0 4
        %1157 = vperm.xlu0 %1156, %v565
        %v1158 = vpop.permute.xlu0 %1157
        %1160 = vset.pattern.permute.xlu0 4
        %1161 = vperm.xlu0 %1160, %v566
        %v1162 = vpop.permute.xlu0 %1161
        %1164 = vset.pattern.permute.xlu0 4
        %1165 = vperm.xlu0 %1164, %v567
        %v1166 = vpop.permute.xlu0 %1165
        %1168 = vset.pattern.permute.xlu0 4
        %1169 = vperm.xlu0 %1168, %v568
        %v1170 = vpop.permute.xlu0 %1169
        %1172 = vset.pattern.permute.xlu0 4
        %1173 = vperm.xlu0 %1172, %v569
        %v1174 = vpop.permute.xlu0 %1173
        %1176 = vset.pattern.permute.xlu0 4
        %1177 = vperm.xlu0 %1176, %v570
        %v1178 = vpop.permute.xlu0 %1177
        %1180 = vset.pattern.permute.xlu0 4
        %1181 = vperm.xlu0 %1180, %v571
        %v1182 = vpop.permute.xlu0 %1181
        %v1184 = vmul.f32 %v1122, %v1104
        %v1185 = vmul.f32 %v1126, %v1105
        %v1186 = vmul.f32 %v1130, %v1106
        %v1187 = vmul.f32 %v1134, %v1107
        %v1188 = vmul.f32 %v1138, %v1108
        %v1189 = vmul.f32 %v1142, %v1109
        %v1190 = vmul.f32 %v1146, %v1110
        %v1191 = vmul.f32 %v1150, %v1111
        %v1192 = vmul.f32 %v1154, %v1112
        %v1193 = vmul.f32 %v1158, %v1113
        %v1194 = vmul.f32 %v1162, %v1114
        %v1195 = vmul.f32 %v1166, %v1115
        %v1196 = vmul.f32 %v1170, %v1116
        %v1197 = vmul.f32 %v1174, %v1117
        %v1198 = vmul.f32 %v1178, %v1118
        %v1199 = vmul.f32 %v1182, %v1119
        %v1200 = vadd.f32 %v1071, %v1184
        %v1201 = vadd.f32 %v1072, %v1185
        %v1202 = vadd.f32 %v1073, %v1186
        %v1203 = vadd.f32 %v1074, %v1187
        %v1204 = vadd.f32 %v1075, %v1188
        %v1205 = vadd.f32 %v1076, %v1189
        %v1206 = vadd.f32 %v1077, %v1190
        %v1207 = vadd.f32 %v1078, %v1191
        %v1208 = vadd.f32 %v1079, %v1192
        %v1209 = vadd.f32 %v1080, %v1193
        %v1210 = vadd.f32 %v1081, %v1194
        %v1211 = vadd.f32 %v1082, %v1195
        %v1212 = vadd.f32 %v1083, %v1196
        %v1213 = vadd.f32 %v1084, %v1197
        %v1214 = vadd.f32 %v1085, %v1198
        %v1215 = vadd.f32 %v1086, %v1199
        %s1216 = scalar_lea.vmem %s298, 320 [#allocation6]
        %v1217 = vld [vmem:[%s1216] sm:$0xf]
        %v1218 = vld [vmem:[%s1216 + $0x4] sm:$0xf]
        %v1219 = vld [vmem:[%s1216 + $0x8] sm:$0xf]
        %v1220 = vld [vmem:[%s1216 + $0xc] sm:$0xf]
        %v1221 = vld [vmem:[%s1216 + $0x10] sm:$0xf]
        %v1222 = vld [vmem:[%s1216 + $0x14] sm:$0xf]
        %v1223 = vld [vmem:[%s1216 + $0x18] sm:$0xf]
        %v1224 = vld [vmem:[%s1216 + $0x1c] sm:$0xf]
        %v1225 = vld [vmem:[%s1216 + $0x20] sm:$0xf]
        %v1226 = vld [vmem:[%s1216 + $0x24] sm:$0xf]
        %v1227 = vld [vmem:[%s1216 + $0x28] sm:$0xf]
        %v1228 = vld [vmem:[%s1216 + $0x2c] sm:$0xf]
        %v1229 = vld [vmem:[%s1216 + $0x30] sm:$0xf]
        %v1230 = vld [vmem:[%s1216 + $0x34] sm:$0xf]
        %v1231 = vld [vmem:[%s1216 + $0x38] sm:$0xf]
        %v1232 = vld [vmem:[%s1216 + $0x3c] sm:$0xf]
        %v1233 = vunpack.c.l.bf16 %v1217
        %v1234 = vunpack.c.l.bf16 %v1218
        %v1235 = vunpack.c.l.bf16 %v1219
        %v1236 = vunpack.c.l.bf16 %v1220
        %v1237 = vunpack.c.l.bf16 %v1221
        %v1238 = vunpack.c.l.bf16 %v1222
        %v1239 = vunpack.c.l.bf16 %v1223
        %v1240 = vunpack.c.l.bf16 %v1224
        %v1241 = vunpack.c.l.bf16 %v1225
        %v1242 = vunpack.c.l.bf16 %v1226
        %v1243 = vunpack.c.l.bf16 %v1227
        %v1244 = vunpack.c.l.bf16 %v1228
        %v1245 = vunpack.c.l.bf16 %v1229
        %v1246 = vunpack.c.l.bf16 %v1230
        %v1247 = vunpack.c.l.bf16 %v1231
        %v1248 = vunpack.c.l.bf16 %v1232
        %1249 = vset.pattern.permute.xlu0 5
        %1250 = vperm.xlu0 %1249, %v556
        %v1251 = vpop.permute.xlu0 %1250
        %1253 = vset.pattern.permute.xlu0 5
        %1254 = vperm.xlu0 %1253, %v557
        %v1255 = vpop.permute.xlu0 %1254
        %1257 = vset.pattern.permute.xlu0 5
        %1258 = vperm.xlu0 %1257, %v558
        %v1259 = vpop.permute.xlu0 %1258
        %1261 = vset.pattern.permute.xlu0 5
        %1262 = vperm.xlu0 %1261, %v559
        %v1263 = vpop.permute.xlu0 %1262
        %1265 = vset.pattern.permute.xlu0 5
        %1266 = vperm.xlu0 %1265, %v560
        %v1267 = vpop.permute.xlu0 %1266
        %1269 = vset.pattern.permute.xlu0 5
        %1270 = vperm.xlu0 %1269, %v561
        %v1271 = vpop.permute.xlu0 %1270
        %1273 = vset.pattern.permute.xlu0 5
        %1274 = vperm.xlu0 %1273, %v562
        %v1275 = vpop.permute.xlu0 %1274
        %1277 = vset.pattern.permute.xlu0 5
        %1278 = vperm.xlu0 %1277, %v563
        %v1279 = vpop.permute.xlu0 %1278
        %1281 = vset.pattern.permute.xlu0 5
        %1282 = vperm.xlu0 %1281, %v564
        %v1283 = vpop.permute.xlu0 %1282
        %1285 = vset.pattern.permute.xlu0 5
        %1286 = vperm.xlu0 %1285, %v565
        %v1287 = vpop.permute.xlu0 %1286
        %1289 = vset.pattern.permute.xlu0 5
        %1290 = vperm.xlu0 %1289, %v566
        %v1291 = vpop.permute.xlu0 %1290
        %1293 = vset.pattern.permute.xlu0 5
        %1294 = vperm.xlu0 %1293, %v567
        %v1295 = vpop.permute.xlu0 %1294
        %1297 = vset.pattern.permute.xlu0 5
        %1298 = vperm.xlu0 %1297, %v568
        %v1299 = vpop.permute.xlu0 %1298
        %1301 = vset.pattern.permute.xlu0 5
        %1302 = vperm.xlu0 %1301, %v569
        %v1303 = vpop.permute.xlu0 %1302
        %1305 = vset.pattern.permute.xlu0 5
        %1306 = vperm.xlu0 %1305, %v570
        %v1307 = vpop.permute.xlu0 %1306
        %1309 = vset.pattern.permute.xlu0 5
        %1310 = vperm.xlu0 %1309, %v571
        %v1311 = vpop.permute.xlu0 %1310
        %v1313 = vmul.f32 %v1251, %v1233
        %v1314 = vmul.f32 %v1255, %v1234
        %v1315 = vmul.f32 %v1259, %v1235
        %v1316 = vmul.f32 %v1263, %v1236
        %v1317 = vmul.f32 %v1267, %v1237
        %v1318 = vmul.f32 %v1271, %v1238
        %v1319 = vmul.f32 %v1275, %v1239
        %v1320 = vmul.f32 %v1279, %v1240
        %v1321 = vmul.f32 %v1283, %v1241
        %v1322 = vmul.f32 %v1287, %v1242
        %v1323 = vmul.f32 %v1291, %v1243
        %v1324 = vmul.f32 %v1295, %v1244
        %v1325 = vmul.f32 %v1299, %v1245
        %v1326 = vmul.f32 %v1303, %v1246
        %v1327 = vmul.f32 %v1307, %v1247
        %v1328 = vmul.f32 %v1311, %v1248
        %v1329 = vadd.f32 %v1200, %v1313
        %v1330 = vadd.f32 %v1201, %v1314
        %v1331 = vadd.f32 %v1202, %v1315
        %v1332 = vadd.f32 %v1203, %v1316
        %v1333 = vadd.f32 %v1204, %v1317
        %v1334 = vadd.f32 %v1205, %v1318
        %v1335 = vadd.f32 %v1206, %v1319
        %v1336 = vadd.f32 %v1207, %v1320
        %v1337 = vadd.f32 %v1208, %v1321
        %v1338 = vadd.f32 %v1209, %v1322
        %v1339 = vadd.f32 %v1210, %v1323
        %v1340 = vadd.f32 %v1211, %v1324
        %v1341 = vadd.f32 %v1212, %v1325
        %v1342 = vadd.f32 %v1213, %v1326
        %v1343 = vadd.f32 %v1214, %v1327
        %v1344 = vadd.f32 %v1215, %v1328
        %s1345 = scalar_lea.vmem %s298, 384 [#allocation6]
        %v1346 = vld [vmem:[%s1345] sm:$0xf]
        %v1347 = vld [vmem:[%s1345 + $0x4] sm:$0xf]
        %v1348 = vld [vmem:[%s1345 + $0x8] sm:$0xf]
        %v1349 = vld [vmem:[%s1345 + $0xc] sm:$0xf]
        %v1350 = vld [vmem:[%s1345 + $0x10] sm:$0xf]
        %v1351 = vld [vmem:[%s1345 + $0x14] sm:$0xf]
        %v1352 = vld [vmem:[%s1345 + $0x18] sm:$0xf]
        %v1353 = vld [vmem:[%s1345 + $0x1c] sm:$0xf]
        %v1354 = vld [vmem:[%s1345 + $0x20] sm:$0xf]
        %v1355 = vld [vmem:[%s1345 + $0x24] sm:$0xf]
        %v1356 = vld [vmem:[%s1345 + $0x28] sm:$0xf]
        %v1357 = vld [vmem:[%s1345 + $0x2c] sm:$0xf]
        %v1358 = vld [vmem:[%s1345 + $0x30] sm:$0xf]
        %v1359 = vld [vmem:[%s1345 + $0x34] sm:$0xf]
        %v1360 = vld [vmem:[%s1345 + $0x38] sm:$0xf]
        %v1361 = vld [vmem:[%s1345 + $0x3c] sm:$0xf]
        %v1362 = vunpack.c.l.bf16 %v1346
        %v1363 = vunpack.c.l.bf16 %v1347
        %v1364 = vunpack.c.l.bf16 %v1348
        %v1365 = vunpack.c.l.bf16 %v1349
        %v1366 = vunpack.c.l.bf16 %v1350
        %v1367 = vunpack.c.l.bf16 %v1351
        %v1368 = vunpack.c.l.bf16 %v1352
        %v1369 = vunpack.c.l.bf16 %v1353
        %v1370 = vunpack.c.l.bf16 %v1354
        %v1371 = vunpack.c.l.bf16 %v1355
        %v1372 = vunpack.c.l.bf16 %v1356
        %v1373 = vunpack.c.l.bf16 %v1357
        %v1374 = vunpack.c.l.bf16 %v1358
        %v1375 = vunpack.c.l.bf16 %v1359
        %v1376 = vunpack.c.l.bf16 %v1360
        %v1377 = vunpack.c.l.bf16 %v1361
        %1378 = vset.pattern.permute.xlu0 6
        %1379 = vperm.xlu0 %1378, %v556
        %v1380 = vpop.permute.xlu0 %1379
        %1382 = vset.pattern.permute.xlu0 6
        %1383 = vperm.xlu0 %1382, %v557
        %v1384 = vpop.permute.xlu0 %1383
        %1386 = vset.pattern.permute.xlu0 6
        %1387 = vperm.xlu0 %1386, %v558
        %v1388 = vpop.permute.xlu0 %1387
        %1390 = vset.pattern.permute.xlu0 6
        %1391 = vperm.xlu0 %1390, %v559
        %v1392 = vpop.permute.xlu0 %1391
        %1394 = vset.pattern.permute.xlu0 6
        %1395 = vperm.xlu0 %1394, %v560
        %v1396 = vpop.permute.xlu0 %1395
        %1398 = vset.pattern.permute.xlu0 6
        %1399 = vperm.xlu0 %1398, %v561
        %v1400 = vpop.permute.xlu0 %1399
        %1402 = vset.pattern.permute.xlu0 6
        %1403 = vperm.xlu0 %1402, %v562
        %v1404 = vpop.permute.xlu0 %1403
        %1406 = vset.pattern.permute.xlu0 6
        %1407 = vperm.xlu0 %1406, %v563
        %v1408 = vpop.permute.xlu0 %1407
        %1410 = vset.pattern.permute.xlu0 6
        %1411 = vperm.xlu0 %1410, %v564
        %v1412 = vpop.permute.xlu0 %1411
        %1414 = vset.pattern.permute.xlu0 6
        %1415 = vperm.xlu0 %1414, %v565
        %v1416 = vpop.permute.xlu0 %1415
        %1418 = vset.pattern.permute.xlu0 6
        %1419 = vperm.xlu0 %1418, %v566
        %v1420 = vpop.permute.xlu0 %1419
        %1422 = vset.pattern.permute.xlu0 6
        %1423 = vperm.xlu0 %1422, %v567
        %v1424 = vpop.permute.xlu0 %1423
        %1426 = vset.pattern.permute.xlu0 6
        %1427 = vperm.xlu0 %1426, %v568
        %v1428 = vpop.permute.xlu0 %1427
        %1430 = vset.pattern.permute.xlu0 6
        %1431 = vperm.xlu0 %1430, %v569
        %v1432 = vpop.permute.xlu0 %1431
        %1434 = vset.pattern.permute.xlu0 6
        %1435 = vperm.xlu0 %1434, %v570
        %v1436 = vpop.permute.xlu0 %1435
        %1438 = vset.pattern.permute.xlu0 6
        %1439 = vperm.xlu0 %1438, %v571
        %v1440 = vpop.permute.xlu0 %1439
        %v1442 = vmul.f32 %v1380, %v1362
        %v1443 = vmul.f32 %v1384, %v1363
        %v1444 = vmul.f32 %v1388, %v1364
        %v1445 = vmul.f32 %v1392, %v1365
        %v1446 = vmul.f32 %v1396, %v1366
        %v1447 = vmul.f32 %v1400, %v1367
        %v1448 = vmul.f32 %v1404, %v1368
        %v1449 = vmul.f32 %v1408, %v1369
        %v1450 = vmul.f32 %v1412, %v1370
        %v1451 = vmul.f32 %v1416, %v1371
        %v1452 = vmul.f32 %v1420, %v1372
        %v1453 = vmul.f32 %v1424, %v1373
        %v1454 = vmul.f32 %v1428, %v1374
        %v1455 = vmul.f32 %v1432, %v1375
        %v1456 = vmul.f32 %v1436, %v1376
        %v1457 = vmul.f32 %v1440, %v1377
        %v1458 = vadd.f32 %v1329, %v1442
        %v1459 = vadd.f32 %v1330, %v1443
        %v1460 = vadd.f32 %v1331, %v1444
        %v1461 = vadd.f32 %v1332, %v1445
        %v1462 = vadd.f32 %v1333, %v1446
        %v1463 = vadd.f32 %v1334, %v1447
        %v1464 = vadd.f32 %v1335, %v1448
        %v1465 = vadd.f32 %v1336, %v1449
        %v1466 = vadd.f32 %v1337, %v1450
        %v1467 = vadd.f32 %v1338, %v1451
        %v1468 = vadd.f32 %v1339, %v1452
        %v1469 = vadd.f32 %v1340, %v1453
        %v1470 = vadd.f32 %v1341, %v1454
        %v1471 = vadd.f32 %v1342, %v1455
        %v1472 = vadd.f32 %v1343, %v1456
        %v1473 = vadd.f32 %v1344, %v1457
        %s1474 = scalar_lea.vmem %s298, 448 [#allocation6]
        %v1475 = vld [vmem:[%s1474] sm:$0xf]
        %v1476 = vld [vmem:[%s1474 + $0x4] sm:$0xf]
        %v1477 = vld [vmem:[%s1474 + $0x8] sm:$0xf]
        %v1478 = vld [vmem:[%s1474 + $0xc] sm:$0xf]
        %v1479 = vld [vmem:[%s1474 + $0x10] sm:$0xf]
        %v1480 = vld [vmem:[%s1474 + $0x14] sm:$0xf]
        %v1481 = vld [vmem:[%s1474 + $0x18] sm:$0xf]
        %v1482 = vld [vmem:[%s1474 + $0x1c] sm:$0xf]
        %v1483 = vld [vmem:[%s1474 + $0x20] sm:$0xf]
        %v1484 = vld [vmem:[%s1474 + $0x24] sm:$0xf]
        %v1485 = vld [vmem:[%s1474 + $0x28] sm:$0xf]
        %v1486 = vld [vmem:[%s1474 + $0x2c] sm:$0xf]
        %v1487 = vld [vmem:[%s1474 + $0x30] sm:$0xf]
        %v1488 = vld [vmem:[%s1474 + $0x34] sm:$0xf]
        %v1489 = vld [vmem:[%s1474 + $0x38] sm:$0xf]
        %v1490 = vld [vmem:[%s1474 + $0x3c] sm:$0xf]
        %v1491 = vunpack.c.l.bf16 %v1475
        %v1492 = vunpack.c.l.bf16 %v1476
        %v1493 = vunpack.c.l.bf16 %v1477
        %v1494 = vunpack.c.l.bf16 %v1478
        %v1495 = vunpack.c.l.bf16 %v1479
        %v1496 = vunpack.c.l.bf16 %v1480
        %v1497 = vunpack.c.l.bf16 %v1481
        %v1498 = vunpack.c.l.bf16 %v1482
        %v1499 = vunpack.c.l.bf16 %v1483
        %v1500 = vunpack.c.l.bf16 %v1484
        %v1501 = vunpack.c.l.bf16 %v1485
        %v1502 = vunpack.c.l.bf16 %v1486
        %v1503 = vunpack.c.l.bf16 %v1487
        %v1504 = vunpack.c.l.bf16 %v1488
        %v1505 = vunpack.c.l.bf16 %v1489
        %v1506 = vunpack.c.l.bf16 %v1490
        %1507 = vset.pattern.permute.xlu0 7
        %1508 = vperm.xlu0 %1507, %v556
        %v1509 = vpop.permute.xlu0 %1508
        %1511 = vset.pattern.permute.xlu0 7
        %1512 = vperm.xlu0 %1511, %v557
        %v1513 = vpop.permute.xlu0 %1512
        %1515 = vset.pattern.permute.xlu0 7
        %1516 = vperm.xlu0 %1515, %v558
        %v1517 = vpop.permute.xlu0 %1516
        %1519 = vset.pattern.permute.xlu0 7
        %1520 = vperm.xlu0 %1519, %v559
        %v1521 = vpop.permute.xlu0 %1520
        %1523 = vset.pattern.permute.xlu0 7
        %1524 = vperm.xlu0 %1523, %v560
        %v1525 = vpop.permute.xlu0 %1524
        %1527 = vset.pattern.permute.xlu0 7
        %1528 = vperm.xlu0 %1527, %v561
        %v1529 = vpop.permute.xlu0 %1528
        %1531 = vset.pattern.permute.xlu0 7
        %1532 = vperm.xlu0 %1531, %v562
        %v1533 = vpop.permute.xlu0 %1532
        %1535 = vset.pattern.permute.xlu0 7
        %1536 = vperm.xlu0 %1535, %v563
        %v1537 = vpop.permute.xlu0 %1536
        %1539 = vset.pattern.permute.xlu0 7
        %1540 = vperm.xlu0 %1539, %v564
        %v1541 = vpop.permute.xlu0 %1540
        %1543 = vset.pattern.permute.xlu0 7
        %1544 = vperm.xlu0 %1543, %v565
        %v1545 = vpop.permute.xlu0 %1544
        %1547 = vset.pattern.permute.xlu0 7
        %1548 = vperm.xlu0 %1547, %v566
        %v1549 = vpop.permute.xlu0 %1548
        %1551 = vset.pattern.permute.xlu0 7
        %1552 = vperm.xlu0 %1551, %v567
        %v1553 = vpop.permute.xlu0 %1552
        %1555 = vset.pattern.permute.xlu0 7
        %1556 = vperm.xlu0 %1555, %v568
        %v1557 = vpop.permute.xlu0 %1556
        %1559 = vset.pattern.permute.xlu0 7
        %1560 = vperm.xlu0 %1559, %v569
        %v1561 = vpop.permute.xlu0 %1560
        %1563 = vset.pattern.permute.xlu0 7
        %1564 = vperm.xlu0 %1563, %v570
        %v1565 = vpop.permute.xlu0 %1564
        %1567 = vset.pattern.permute.xlu0 7
        %1568 = vperm.xlu0 %1567, %v571
        %v1569 = vpop.permute.xlu0 %1568
        %v1571 = vmul.f32 %v1509, %v1491
        %v1572 = vmul.f32 %v1513, %v1492
        %v1573 = vmul.f32 %v1517, %v1493
        %v1574 = vmul.f32 %v1521, %v1494
        %v1575 = vmul.f32 %v1525, %v1495
        %v1576 = vmul.f32 %v1529, %v1496
        %v1577 = vmul.f32 %v1533, %v1497
        %v1578 = vmul.f32 %v1537, %v1498
        %v1579 = vmul.f32 %v1541, %v1499
        %v1580 = vmul.f32 %v1545, %v1500
        %v1581 = vmul.f32 %v1549, %v1501
        %v1582 = vmul.f32 %v1553, %v1502
        %v1583 = vmul.f32 %v1557, %v1503
        %v1584 = vmul.f32 %v1561, %v1504
        %v1585 = vmul.f32 %v1565, %v1505
        %v1586 = vmul.f32 %v1569, %v1506
        %v1587 = vadd.f32 %v1458, %v1571
        %v1588 = vadd.f32 %v1459, %v1572
        %v1589 = vadd.f32 %v1460, %v1573
        %v1590 = vadd.f32 %v1461, %v1574
        %v1591 = vadd.f32 %v1462, %v1575
        %v1592 = vadd.f32 %v1463, %v1576
        %v1593 = vadd.f32 %v1464, %v1577
        %v1594 = vadd.f32 %v1465, %v1578
        %v1595 = vadd.f32 %v1466, %v1579
        %v1596 = vadd.f32 %v1467, %v1580
        %v1597 = vadd.f32 %v1468, %v1581
        %v1598 = vadd.f32 %v1469, %v1582
        %v1599 = vadd.f32 %v1470, %v1583
        %v1600 = vadd.f32 %v1471, %v1584
        %v1601 = vadd.f32 %v1472, %v1585
        %v1602 = vadd.f32 %v1473, %v1586
        %v1603 = vpack.c.bf16 %v1588, %v1587
        %v1604 = vpack.c.bf16 %v1590, %v1589
        %v1605 = vpack.c.bf16 %v1592, %v1591
        %v1606 = vpack.c.bf16 %v1594, %v1593
        %v1607 = vpack.c.bf16 %v1596, %v1595
        %v1608 = vpack.c.bf16 %v1598, %v1597
        %v1609 = vpack.c.bf16 %v1600, %v1599
        %v1610 = vpack.c.bf16 %v1602, %v1601
        %v1619 = vunpack.c.l.b16 %v1603
        %v1620 = vunpack.c.h.b16 %v1603
        %v1621 = vunpack.c.l.b16 %v1604
        %v1622 = vunpack.c.h.b16 %v1604
        %v1623 = vunpack.c.l.b16 %v1605
        %v1624 = vunpack.c.h.b16 %v1605
        %v1625 = vunpack.c.l.b16 %v1606
        %v1626 = vunpack.c.h.b16 %v1606
        %v1627 = vunpack.c.l.b16 %v1607
        %v1628 = vunpack.c.h.b16 %v1607
        %v1629 = vunpack.c.l.b16 %v1608
        %v1630 = vunpack.c.h.b16 %v1608
        %v1631 = vunpack.c.l.b16 %v1609
        %v1632 = vunpack.c.h.b16 %v1609
        %v1633 = vunpack.c.l.b16 %v1610
        %v1634 = vunpack.c.h.b16 %v1610
        %v1635 = vpack.c.b16 %v1619, %v1619
        %v1636 = vpack.c.b16 %v1620, %v1620
        %v1637 = vpack.c.b16 %v1621, %v1621
        %v1638 = vpack.c.b16 %v1622, %v1622
        %v1639 = vpack.c.b16 %v1623, %v1623
        %v1640 = vpack.c.b16 %v1624, %v1624
        %v1641 = vpack.c.b16 %v1625, %v1625
        %v1642 = vpack.c.b16 %v1626, %v1626
        %v1643 = vpack.c.b16 %v1627, %v1627
        %v1644 = vpack.c.b16 %v1628, %v1628
        %v1645 = vpack.c.b16 %v1629, %v1629
        %v1646 = vpack.c.b16 %v1630, %v1630
        %v1647 = vpack.c.b16 %v1631, %v1631
        %v1648 = vpack.c.b16 %v1632, %v1632
        %v1649 = vpack.c.b16 %v1633, %v1633
        %v1650 = vpack.c.b16 %v1634, %v1634
        %1667 = vst [vmem:[%s327] sm:$0xf] %v1635
        %1668 = vst [vmem:[%s327 + $0x4] sm:$0xf] %v1636
        %1669 = vst [vmem:[%s327 + $0x8] sm:$0xf] %v1637
        %1670 = vst [vmem:[%s327 + $0xc] sm:$0xf] %v1638
        %1671 = vst [vmem:[%s327 + $0x10] sm:$0xf] %v1639
        %1672 = vst [vmem:[%s327 + $0x14] sm:$0xf] %v1640
        %1673 = vst [vmem:[%s327 + $0x18] sm:$0xf] %v1641
        %1674 = vst [vmem:[%s327 + $0x1c] sm:$0xf] %v1642
        %1675 = vst [vmem:[%s327 + $0x20] sm:$0xf] %v1643
        %1676 = vst [vmem:[%s327 + $0x24] sm:$0xf] %v1644
        %1677 = vst [vmem:[%s327 + $0x28] sm:$0xf] %v1645
        %1678 = vst [vmem:[%s327 + $0x2c] sm:$0xf] %v1646
        %1679 = vst [vmem:[%s327 + $0x30] sm:$0xf] %v1647
        %1680 = vst [vmem:[%s327 + $0x34] sm:$0xf] %v1648
        %1681 = vst [vmem:[%s327 + $0x38] sm:$0xf] %v1649
        %1682 = vst [vmem:[%s327 + $0x3c] sm:$0xf] %v1650
        %s1683 = sand.u32 %s147, 1
        %s1684 = scalar_lea.sflag [#allocation5], %s1683
        %s1685 = sand.u32 %s147, 1
        %s1686 = smul.addr %s1685, 64
        %s1687 = scalar_lea.vmem [#allocation8], %s1686
        %s1688 = sand.u32 %s173, 1
        %s1689 = scalar_lea.sflag [#allocation10], %s1688
        %s1690 = sand.u32 %s173, 1
        %s1691 = smul.addr %s1690, 8
        %s1692 = scalar_lea.vmem [#allocation9], %s1691
        // Predicated region
        $region49: #{tpu_custom_call.1} parent=35 // pred_check
          %p1693 = pneg %p157
        $region50: #{tpu_custom_call.1} parent=35 // pred_check_branch
          %1695 = sbr.rel (%p1693) target = $region52
        $region51: #{tpu_custom_call.1} parent=35 // pred_region
          %s1696 = smul.u32 16, %s33
          %s1698 = ssub.s32 1024, 1024
          %1699 = vsyncadd %s1684, %s1698
          %s1700 = sadd.s32 %s34, %s1696
          %s1701 = smul.addr %s1700, 64
          %s1702 = scalar_lea.hbm %s4, %s1701
          %s1703 = sshll.u32 %s1687, 4
          %s1704 = int_to_ptr.vmem [resolvable:$true] %s1703
          %1709 = dma.vmem_to_hbm [thread:$0]  %s1704, 1024, %s1702, %s1684, 64, 64, 4
        $region52: #{tpu_custom_call.1} parent=35 // pred_fallthru
          _
        // Predicated region
        $region53: #{tpu_custom_call.1} parent=35 // pred_check
          %p1710 = pneg %p183
        $region54: #{tpu_custom_call.1} parent=35 // pred_check_branch
          %1712 = sbr.rel (%p1710) target = $region56
        $region55: #{tpu_custom_call.1} parent=35 // pred_region
          %s1714 = ssub.s32 128, 128
          %1715 = vsyncadd %s1689, %s1714
          %s1716 = smul.addr %s33, 128
          %s1717 = scalar_lea.hbm %s5, %s1716
          %s1719 = sshll.u32 %s1692, 4
          %s1720 = int_to_ptr.vmem [resolvable:$true] %s1719
          %1722 = dma.vmem_to_hbm [thread:$0]  %s1720, 128, %s1717, %s1689
        $region56: #{tpu_custom_call.1} parent=35 // pred_fallthru
          _
      $region36: #{tpu_custom_call.1} parent=5 // pred_fallthru
        _
      %p1723 = scmp.le.s32.totalorder 2, %s24
      // Predicated region
      $region57: #{tpu_custom_call.1} parent=5 // pred_check
        %p1724 = pneg %p1723
      $region58: #{tpu_custom_call.1} parent=5 // pred_check_branch
        %1726 = sbr.rel (%p1724) target = $region60
      $region59: #{tpu_custom_call.1} parent=5 // pred_region
        %s1727 = ssub.s32 %s24, 2
        // Predicated region
        $region61: #{tpu_custom_call.1} parent=59 // pred_check
          %p1728 = pneg %p163
        $region62: #{tpu_custom_call.1} parent=59 // pred_check_branch
          %1730 = sbr.rel (%p1728) target = $region64
        $region63: #{tpu_custom_call.1} parent=59 // pred_region
          %s1731 = sand.u32 %s148, 1
          %s1732 = scalar_lea.sflag [#allocation5], %s1731
          %s1733 = sand.u32 %s148, 1
          %s1734 = smul.addr %s1733, 64
          %s1735 = scalar_lea.vmem [#allocation8], %s1734
          %1736 = dma.done %s1732, 1024
        $region64: #{tpu_custom_call.1} parent=59 // pred_fallthru
          _
        // Predicated region
        $region65: #{tpu_custom_call.1} parent=59 // pred_check
          %p1737 = pneg %p189
        $region66: #{tpu_custom_call.1} parent=59 // pred_check_branch
          %1739 = sbr.rel (%p1737) target = $region68
        $region67: #{tpu_custom_call.1} parent=59 // pred_region
          %s1740 = sand.u32 %s174, 1
          %s1741 = scalar_lea.sflag [#allocation10], %s1740
          %s1742 = sand.u32 %s174, 1
          %s1743 = smul.addr %s1742, 8
          %s1744 = scalar_lea.vmem [#allocation9], %s1743
          %1745 = dma.done %s1741, 128
        $region68: #{tpu_custom_call.1} parent=59 // pred_fallthru
          _
      $region60: #{tpu_custom_call.1} parent=5 // pred_fallthru
        _
    $region6: #{tpu_custom_call.1} parent=1 // loop_footer
      %s28 = sadd.s32 1, %s24
    $region7: #{tpu_custom_call.1} parent=1 // loop_footer_branch
      %23 = sbr.rel target = $region3
    $region8: #{tpu_custom_call.1} parent=1 // loop_exit
      _
    %1746 = vsyncpa [#allocation4], 1
    %s1747 = scalar_lea.sflag [#allocation4], 1
    %1748 = vsyncpa %s1747, 1
    %1749 = vsyncpa [#allocation7], 1
    %s1750 = scalar_lea.sflag [#allocation7], 1
    %1751 = vsyncpa %s1750, 1
    %1752 = vsyncpa [#allocation5], 1
    %s1753 = scalar_lea.sflag [#allocation5], 1
    %1754 = vsyncpa %s1753, 1
    %1755 = vsyncpa [#allocation10], 1
    %s1756 = scalar_lea.sflag [#allocation10], 1
    %1757 = vsyncpa %s1756, 1

</llo_original>
